<compile_context>
chip_gen: v7x
topology: tpu7x:2x2x1
jax: 0.10.0
libtpu: 0.0.40
codegen_flags: <defaults>
</compile_context>

<pallas_src>
from functools import partial

import jax
import jax.numpy as jnp
from jax.experimental import pallas as pl
from jax.experimental.pallas import tpu as pltpu


NEG_INF = -1e30   # f32-safe mask fill
LN_EPS = 1e-5


# ----------------------------- in-kernel helpers ----------------------------

def _layer_norm(y, g, b):
    mu = jnp.mean(y, axis=-1, keepdims=True)
    var = jnp.mean((y - mu) ** 2, axis=-1, keepdims=True)
    return (y - mu) * jax.lax.rsqrt(var + LN_EPS) * g + b


def _attention_sublayer(x, src, bias, wq, bq, wkv, bkv, wo, bo, g, b,
                        *, heads, dqk, dv, scale):
    # x   (Sq, D)  f32  query-side sequence (also the residual)
    # src (Sk, D)  f32  key/value-side sequence
    # bias (1, Sk) f32  additive key mask (0 = valid, -1e30 = masked)
    q = jnp.dot(x.astype(jnp.bfloat16), wq,
                preferred_element_type=jnp.float32) + bq          # (Sq, H*dqk)
    kv = jnp.dot(src.astype(jnp.bfloat16), wkv,
                 preferred_element_type=jnp.float32) + bkv        # (Sk, H*(dqk+dv))
    k = kv[:, : heads * dqk]                                      # (Sk, H*dqk)
    v = kv[:, heads * dqk:]                                       # (Sk, H*dv)

    # per-head attention (static unroll over small head count); scores,
    # masking and softmax in f32, matmuls in bf16 with f32 accumulation.
    head_outs = []
    for h in range(heads):
        q_h = q[:, h * dqk:(h + 1) * dqk].astype(jnp.bfloat16)    # (Sq, dqk)
        k_h = k[:, h * dqk:(h + 1) * dqk].astype(jnp.bfloat16)    # (Sk, dqk)
        v_h = v[:, h * dv:(h + 1) * dv].astype(jnp.bfloat16)      # (Sk, dv)

        s = jax.lax.dot_general(q_h, k_h, (((1,), (1,)), ((), ())),
                                preferred_element_type=jnp.float32)   # (Sq, Sk)
        s = s * scale + bias

        s_max = jnp.max(s, axis=-1, keepdims=True)
        p = jnp.exp(s - s_max)
        denom = jnp.sum(p, axis=-1, keepdims=True)
        p = p * pl.reciprocal(denom, approx=True)                 # EUP divide

        head_outs.append(
            jnp.dot(p.astype(jnp.bfloat16), v_h,
                    preferred_element_type=jnp.float32))          # (Sq, dv)

    attn = jnp.concatenate(head_outs, axis=-1)                    # (Sq, H*dv)

    # output projection + residual + LayerNorm (all in-VMEM)
    y = jnp.dot(attn.astype(jnp.bfloat16), wo,
                preferred_element_type=jnp.float32) + bo          # (Sq, D)
    return _layer_norm(y + x, g, b)


# ----------------------------- fused layer kernel ---------------------------

def _decoder_layer_kernel(seq_ref, enc_ref, self_bias_ref, cross_bias_ref,
                          # masked self-attention sublayer weights
                          wq1, bq1, wkv1, bkv1, wo1, bo1, g1, b1,
                          # cross-attention sublayer weights
                          wq2, bq2, wkv2, bkv2, wo2, bo2, g2, b2,
                          # feed-forward sublayer weights
                          w1, fb1, w2, fb2, g3, b3,
                          o_ref, *, heads, dqk, dv, scale):
    x = seq_ref[0]                                                # (Sq, D) f32
    enc = enc_ref[0]                                              # (Sk, D) f32

    # 1) masked self-attention sublayer
    x1 = _attention_sublayer(
        x, x, self_bias_ref[0],
        wq1[...], bq1[...], wkv1[...], bkv1[...], wo1[...], bo1[...],
        g1[...], b1[...], heads=heads, dqk=dqk, dv=dv, scale=scale)

    # 2) cross-attention sublayer over the encoder output
    x2 = _attention_sublayer(
        x1, enc, cross_bias_ref[0],
        wq2[...], bq2[...], wkv2[...], bkv2[...], wo2[...], bo2[...],
        g2[...], b2[...], heads=heads, dqk=dqk, dv=dv, scale=scale)

    # 3) feed-forward sublayer: W1 + ReLU + W2 + residual + LayerNorm
    h = jnp.dot(x2.astype(jnp.bfloat16), w1[...],
                preferred_element_type=jnp.float32) + fb1[...]    # (Sq, dff)
    h = jnp.maximum(h, 0.0)
    y = jnp.dot(h.astype(jnp.bfloat16), w2[...],
                preferred_element_type=jnp.float32) + fb2[...]    # (Sq, D)
    o_ref[0] = _layer_norm(y + x2, g3[...], b3[...])


# ----------------------------- kernel wrapper --------------------------------

def _resident_spec(arr):
    # grid-resident full-array block (constant index_map -> loaded once)
    nd = arr.ndim
    return pl.BlockSpec(arr.shape, lambda b, _nd=nd: (0,) * _nd)


@partial(jax.jit, static_argnames=("heads", "dqk", "dv"))
def decoder_layer(params, seq, seq_mask, encoder_output, encoder_mask,
                  *, heads, dqk, dv):
    B, Sq, D = seq.shape
    Sk = encoder_output.shape[1]
    scale = 1.0 / float(dqk) ** 0.5

    # additive key-mask biases: 0 for valid keys, -1e30 for masked keys
    self_bias = (1.0 - seq_mask.astype(jnp.float32)).reshape(B, 1, Sq) * NEG_INF
    cross_bias = (1.0 - encoder_mask.astype(jnp.float32)).reshape(B, 1, Sk) * NEG_INF

    pm, pc, pf = params["masked_attn"], params["cross_attn"], params["ffn"]
    weights = (pm["wq"], pm["bq"], pm["wkv"], pm["bkv"], pm["wo"], pm["bo"],
               pm["ln_g"], pm["ln_b"],
               pc["wq"], pc["bq"], pc["wkv"], pc["bkv"], pc["wo"], pc["bo"],
               pc["ln_g"], pc["ln_b"],
               pf["w1"], pf["b1"], pf["w2"], pf["b2"], pf["ln_g"], pf["ln_b"])

    kernel = partial(_decoder_layer_kernel,
                     heads=heads, dqk=dqk, dv=dv, scale=scale)
    return pl.pallas_call(
        kernel,
        out_shape=jax.ShapeDtypeStruct((B, Sq, D), jnp.float32),
        grid=(B,),
        in_specs=[
            pl.BlockSpec((1, Sq, D), lambda b: (b, 0, 0)),
            pl.BlockSpec((1, Sk, D), lambda b: (b, 0, 0)),
            pl.BlockSpec((1, 1, Sq), lambda b: (b, 0, 0)),
            pl.BlockSpec((1, 1, Sk), lambda b: (b, 0, 0)),
        ] + [_resident_spec(w) for w in weights],
        out_specs=pl.BlockSpec((1, Sq, D), lambda b: (b, 0, 0)),
        compiler_params=pltpu.CompilerParams(
            dimension_semantics=("parallel",)),
    )(seq, encoder_output, self_bias, cross_bias, *weights)


# ----------------------------- parameter init --------------------------------

def _dense(key, din, dout, scale=0.02):
    w = (scale * jax.random.normal(key, (din, dout), jnp.float32)
         ).astype(jnp.bfloat16)                  # matmul weights stored in bf16
    b = jnp.zeros((1, dout), jnp.float32)        # biases stay f32 (epilogue math)
    return w, b


def init_mha_params(key, d_model, H, dqk, dv):
    k = jax.random.split(key, 4)
    wq, bq = _dense(k[0], d_model, H * dqk)
    wk, bk = _dense(k[1], d_model, H * dqk)
    wv, bv = _dense(k[2], d_model, H * dv)
    wo, bo = _dense(k[3], H * dv, d_model)
    # fuse the K and V projections into one wide matmul (split inside kernel)
    wkv = jnp.concatenate([wk, wv], axis=1)
    bkv = jnp.concatenate([bk, bv], axis=1)
    return dict(wq=wq, bq=bq, wkv=wkv, bkv=bkv, wo=wo, bo=bo,
                ln_g=jnp.ones((1, d_model), jnp.float32),
                ln_b=jnp.zeros((1, d_model), jnp.float32))


def init_ffn_params(key, d_model, d_ff):
    k = jax.random.split(key, 2)
    w1, b1 = _dense(k[0], d_model, d_ff)
    w2, b2 = _dense(k[1], d_ff, d_model)
    return dict(w1=w1, b1=b1, w2=w2, b2=b2,
                ln_g=jnp.ones((1, d_model), jnp.float32),
                ln_b=jnp.zeros((1, d_model), jnp.float32))


def init_decoder_params(key, d_model, d_ff, H, dqk, dv):
    k = jax.random.split(key, 3)
    return dict(
        masked_attn=init_mha_params(k[0], d_model, H, dqk, dv),
        cross_attn=init_mha_params(k[1], d_model, H, dqk, dv),
        ffn=init_ffn_params(k[2], d_model, d_ff),
    )


# ----------------------------- pure-JAX reference ----------------------------

def _ref_attention(p, x, src, mask, heads, dqk, dv):
    wq, wkv, wo = (p["wq"].astype(jnp.float32), p["wkv"].astype(jnp.float32),
                   p["wo"].astype(jnp.float32))
    B, Sq, _ = x.shape
    Sk = src.shape[1]
    q = x @ wq + p["bq"]
    kv = src @ wkv + p["bkv"]
    k, v = kv[..., :heads * dqk], kv[..., heads * dqk:]
    qh = q.reshape(B, Sq, heads, dqk).transpose(0, 2, 1, 3)
    kh = k.reshape(B, Sk, heads, dqk).transpose(0, 2, 1, 3)
    vh = v.reshape(B, Sk, heads, dv).transpose(0, 2, 1, 3)
    s = jnp.einsum("bhqd,bhkd->bhqk", qh, kh) / jnp.sqrt(float(dqk))
    s = s + (1.0 - mask.astype(jnp.float32))[:, None, None, :] * NEG_INF
    p_attn = jax.nn.softmax(s, axis=-1)
    o = jnp.einsum("bhqk,bhkd->bhqd", p_attn, vh)
    o = o.transpose(0, 2, 1, 3).reshape(B, Sq, heads * dv)
    y = o @ wo + p["bo"] + x
    mu = y.mean(-1, keepdims=True)
    var = ((y - mu) ** 2).mean(-1, keepdims=True)
    return (y - mu) / jnp.sqrt(var + LN_EPS) * p["ln_g"] + p["ln_b"]


def _ref_decoder(params, seq, seq_mask, enc, enc_mask, heads, dqk, dv):
    x = _ref_attention(params["masked_attn"], seq, seq, seq_mask, heads, dqk, dv)
    x = _ref_attention(params["cross_attn"], x, enc, enc_mask, heads, dqk, dv)
    pf = params["ffn"]
    h = jnp.maximum(x @ pf["w1"].astype(jnp.float32) + pf["b1"], 0.0)
    y = h @ pf["w2"].astype(jnp.float32) + pf["b2"] + x
    mu = y.mean(-1, keepdims=True)
    var = ((y - mu) ** 2).mean(-1, keepdims=True)
    return (y - mu) / jnp.sqrt(var + LN_EPS) * pf["ln_g"] + pf["ln_b"]


# ----------------------------- main -------------------------------------------

if __name__ == "__main__":
    d_model, d_ff = 32, 64
    heads, d_qk, d_v = 2, 8, 8
    B, S_dec, S_enc = 2, 8, 16

    root = jax.random.PRNGKey(0)
    kp, kx, ke = jax.random.split(root, 3)

    params = init_decoder_params(kp, d_model, d_ff, heads, d_qk, d_v)

    seq = jax.random.normal(kx, (B, S_dec, d_model), jnp.float32)
    encoder_output = jax.random.normal(ke, (B, S_enc, d_model), jnp.float32)

    # key-padding masks: 1.0 valid, 0.0 masked (last 2 decoder / 4 encoder
    # positions of batch element 1 are padding)
    seq_mask = jnp.ones((B, S_dec), jnp.float32).at[1, -2:].set(0.0)
    encoder_mask = jnp.ones((B, S_enc), jnp.float32).at[1, -4:].set(0.0)

    out = decoder_layer(params, seq, seq_mask, encoder_output, encoder_mask,
                        heads=heads, dqk=d_qk, dv=d_v)
    out = jax.block_until_ready(out)

    assert out.shape == (B, S_dec, d_model)
    assert bool(jnp.all(jnp.isfinite(out)))

    ref = _ref_decoder(params, seq, seq_mask, encoder_output, encoder_mask,
                       heads, d_qk, d_v)
    max_err = float(jnp.max(jnp.abs(out - ref)))
    assert max_err < 0.15, f"kernel/reference mismatch: max abs err {max_err}"

    print("KERNEL_OK")
</pallas_src>

<mosaic_0001>
module attributes {stable_mosaic.version = 11 : i64} {
  func.func @_decoder_layer_kernel(%arg0: i32, %arg1: memref<1x8x32xf32, #tpu.memory_space<vmem>>, %arg2: memref<1x16x32xf32, #tpu.memory_space<vmem>>, %arg3: memref<1x1x8xf32, #tpu.memory_space<vmem>>, %arg4: memref<1x1x16xf32, #tpu.memory_space<vmem>>, %arg5: memref<32x16xbf16, #tpu.memory_space<vmem>>, %arg6: memref<1x16xf32, #tpu.memory_space<vmem>>, %arg7: memref<32x32xbf16, #tpu.memory_space<vmem>>, %arg8: memref<1x32xf32, #tpu.memory_space<vmem>>, %arg9: memref<16x32xbf16, #tpu.memory_space<vmem>>, %arg10: memref<1x32xf32, #tpu.memory_space<vmem>>, %arg11: memref<1x32xf32, #tpu.memory_space<vmem>>, %arg12: memref<1x32xf32, #tpu.memory_space<vmem>>, %arg13: memref<32x16xbf16, #tpu.memory_space<vmem>>, %arg14: memref<1x16xf32, #tpu.memory_space<vmem>>, %arg15: memref<32x32xbf16, #tpu.memory_space<vmem>>, %arg16: memref<1x32xf32, #tpu.memory_space<vmem>>, %arg17: memref<16x32xbf16, #tpu.memory_space<vmem>>, %arg18: memref<1x32xf32, #tpu.memory_space<vmem>>, %arg19: memref<1x32xf32, #tpu.memory_space<vmem>>, %arg20: memref<1x32xf32, #tpu.memory_space<vmem>>, %arg21: memref<32x64xbf16, #tpu.memory_space<vmem>>, %arg22: memref<1x64xf32, #tpu.memory_space<vmem>>, %arg23: memref<64x32xbf16, #tpu.memory_space<vmem>>, %arg24: memref<1x32xf32, #tpu.memory_space<vmem>>, %arg25: memref<1x32xf32, #tpu.memory_space<vmem>>, %arg26: memref<1x32xf32, #tpu.memory_space<vmem>>, %arg27: memref<1x8x32xf32, #tpu.memory_space<vmem>>) attributes {dimension_semantics = [#tpu.dimension_semantics<parallel>], iteration_bounds = array<i64: 2>, scalar_prefetch = 0 : i64, scratch_operands = 0 : i64, tpu.core_type = #tpu.core_type<tc>, window_params = [{transform_indices = @transform_0, window_bounds = array<i64: 1, 8, 32>}, {transform_indices = @transform_1, window_bounds = array<i64: 1, 16, 32>}, {transform_indices = @transform_2, window_bounds = array<i64: 1, 1, 8>}, {transform_indices = @transform_3, window_bounds = array<i64: 1, 1, 16>}, {pipeline_mode = #tpu.pipeline_mode<synchronous>, transform_indices = @transform_4, window_bounds = array<i64: 32, 16>}, {pipeline_mode = #tpu.pipeline_mode<synchronous>, transform_indices = @transform_5, window_bounds = array<i64: 1, 16>}, {pipeline_mode = #tpu.pipeline_mode<synchronous>, transform_indices = @transform_6, window_bounds = array<i64: 32, 32>}, {pipeline_mode = #tpu.pipeline_mode<synchronous>, transform_indices = @transform_7, window_bounds = array<i64: 1, 32>}, {pipeline_mode = #tpu.pipeline_mode<synchronous>, transform_indices = @transform_8, window_bounds = array<i64: 16, 32>}, {pipeline_mode = #tpu.pipeline_mode<synchronous>, transform_indices = @transform_9, window_bounds = array<i64: 1, 32>}, {pipeline_mode = #tpu.pipeline_mode<synchronous>, transform_indices = @transform_10, window_bounds = array<i64: 1, 32>}, {pipeline_mode = #tpu.pipeline_mode<synchronous>, transform_indices = @transform_11, window_bounds = array<i64: 1, 32>}, {pipeline_mode = #tpu.pipeline_mode<synchronous>, transform_indices = @transform_12, window_bounds = array<i64: 32, 16>}, {pipeline_mode = #tpu.pipeline_mode<synchronous>, transform_indices = @transform_13, window_bounds = array<i64: 1, 16>}, {pipeline_mode = #tpu.pipeline_mode<synchronous>, transform_indices = @transform_14, window_bounds = array<i64: 32, 32>}, {pipeline_mode = #tpu.pipeline_mode<synchronous>, transform_indices = @transform_15, window_bounds = array<i64: 1, 32>}, {pipeline_mode = #tpu.pipeline_mode<synchronous>, transform_indices = @transform_16, window_bounds = array<i64: 16, 32>}, {pipeline_mode = #tpu.pipeline_mode<synchronous>, transform_indices = @transform_17, window_bounds = array<i64: 1, 32>}, {pipeline_mode = #tpu.pipeline_mode<synchronous>, transform_indices = @transform_18, window_bounds = array<i64: 1, 32>}, {pipeline_mode = #tpu.pipeline_mode<synchronous>, transform_indices = @transform_19, window_bounds = array<i64: 1, 32>}, {pipeline_mode = #tpu.pipeline_mode<synchronous>, transform_indices = @transform_20, window_bounds = array<i64: 32, 64>}, {pipeline_mode = #tpu.pipeline_mode<synchronous>, transform_indices = @transform_21, window_bounds = array<i64: 1, 64>}, {pipeline_mode = #tpu.pipeline_mode<synchronous>, transform_indices = @transform_22, window_bounds = array<i64: 64, 32>}, {pipeline_mode = #tpu.pipeline_mode<synchronous>, transform_indices = @transform_23, window_bounds = array<i64: 1, 32>}, {pipeline_mode = #tpu.pipeline_mode<synchronous>, transform_indices = @transform_24, window_bounds = array<i64: 1, 32>}, {pipeline_mode = #tpu.pipeline_mode<synchronous>, transform_indices = @transform_25, window_bounds = array<i64: 1, 32>}, {transform_indices = @transform_26, window_bounds = array<i64: 1, 8, 32>}]} {
    %c0 = arith.constant 0 : index
    %c0_0 = arith.constant 0 : index
    %c0_1 = arith.constant 0 : index
    %0 = vector.load %arg1[%c0, %c0_0, %c0_1] : memref<1x8x32xf32, #tpu.memory_space<vmem>>, vector<1x8x32xf32>
    %1 = vector.shape_cast %0 : vector<1x8x32xf32> to vector<8x32xf32>
    %c0_2 = arith.constant 0 : index
    %c0_3 = arith.constant 0 : index
    %c0_4 = arith.constant 0 : index
    %2 = vector.load %arg2[%c0_2, %c0_3, %c0_4] : memref<1x16x32xf32, #tpu.memory_space<vmem>>, vector<1x16x32xf32>
    %3 = vector.shape_cast %2 : vector<1x16x32xf32> to vector<16x32xf32>
    %c0_5 = arith.constant 0 : index
    %c0_6 = arith.constant 0 : index
    %c0_7 = arith.constant 0 : index
    %4 = vector.load %arg3[%c0_5, %c0_6, %c0_7] : memref<1x1x8xf32, #tpu.memory_space<vmem>>, vector<1x1x8xf32>
    %5 = vector.shape_cast %4 : vector<1x1x8xf32> to vector<1x8xf32>
    %c0_8 = arith.constant 0 : index
    %c0_9 = arith.constant 0 : index
    %6 = vector.load %arg5[%c0_8, %c0_9] : memref<32x16xbf16, #tpu.memory_space<vmem>>, vector<32x16xbf16>
    %c0_10 = arith.constant 0 : index
    %c0_11 = arith.constant 0 : index
    %7 = vector.load %arg6[%c0_10, %c0_11] : memref<1x16xf32, #tpu.memory_space<vmem>>, vector<1x16xf32>
    %c0_12 = arith.constant 0 : index
    %c0_13 = arith.constant 0 : index
    %8 = vector.load %arg7[%c0_12, %c0_13] : memref<32x32xbf16, #tpu.memory_space<vmem>>, vector<32x32xbf16>
    %c0_14 = arith.constant 0 : index
    %c0_15 = arith.constant 0 : index
    %9 = vector.load %arg8[%c0_14, %c0_15] : memref<1x32xf32, #tpu.memory_space<vmem>>, vector<1x32xf32>
    %c0_16 = arith.constant 0 : index
    %c0_17 = arith.constant 0 : index
    %10 = vector.load %arg9[%c0_16, %c0_17] : memref<16x32xbf16, #tpu.memory_space<vmem>>, vector<16x32xbf16>
    %c0_18 = arith.constant 0 : index
    %c0_19 = arith.constant 0 : index
    %11 = vector.load %arg10[%c0_18, %c0_19] : memref<1x32xf32, #tpu.memory_space<vmem>>, vector<1x32xf32>
    %c0_20 = arith.constant 0 : index
    %c0_21 = arith.constant 0 : index
    %12 = vector.load %arg11[%c0_20, %c0_21] : memref<1x32xf32, #tpu.memory_space<vmem>>, vector<1x32xf32>
    %c0_22 = arith.constant 0 : index
    %c0_23 = arith.constant 0 : index
    %13 = vector.load %arg12[%c0_22, %c0_23] : memref<1x32xf32, #tpu.memory_space<vmem>>, vector<1x32xf32>
    %14 = arith.truncf %1 : vector<8x32xf32> to vector<8x32xbf16>
    %cst = arith.constant dense<0.000000e+00> : vector<8x16xf32>
    %15 = tpu.matmul %14, %6, %cst {dimension_numbers = #tpu.dot_dimension_numbers<[1], [0], [0], [1], [0, 0, 1, 1], [], []>} : vector<8x32xbf16>, vector<32x16xbf16>, vector<8x16xf32> -> vector<8x16xf32>
    %16 = vector.broadcast %7 : vector<1x16xf32> to vector<8x16xf32>
    %17 = arith.addf %15, %16 : vector<8x16xf32>
    %18 = arith.truncf %1 : vector<8x32xf32> to vector<8x32xbf16>
    %cst_24 = arith.constant dense<0.000000e+00> : vector<8x32xf32>
    %19 = tpu.matmul %18, %8, %cst_24 {dimension_numbers = #tpu.dot_dimension_numbers<[1], [0], [0], [1], [0, 0, 1, 1], [], []>} : vector<8x32xbf16>, vector<32x32xbf16>, vector<8x32xf32> -> vector<8x32xf32>
    %20 = vector.broadcast %9 : vector<1x32xf32> to vector<8x32xf32>
    %21 = arith.addf %19, %20 : vector<8x32xf32>
    %22 = vector.extract_strided_slice %21 {offsets = [0, 0], sizes = [8, 16], strides = [1, 1]} : vector<8x32xf32> to vector<8x16xf32>
    %23 = vector.extract_strided_slice %21 {offsets = [0, 16], sizes = [8, 16], strides = [1, 1]} : vector<8x32xf32> to vector<8x16xf32>
    %24 = vector.extract_strided_slice %17 {offsets = [0, 0], sizes = [8, 8], strides = [1, 1]} : vector<8x16xf32> to vector<8x8xf32>
    %25 = arith.truncf %24 : vector<8x8xf32> to vector<8x8xbf16>
    %26 = vector.extract_strided_slice %22 {offsets = [0, 0], sizes = [8, 8], strides = [1, 1]} : vector<8x16xf32> to vector<8x8xf32>
    %27 = arith.truncf %26 : vector<8x8xf32> to vector<8x8xbf16>
    %28 = vector.extract_strided_slice %23 {offsets = [0, 0], sizes = [8, 8], strides = [1, 1]} : vector<8x16xf32> to vector<8x8xf32>
    %29 = arith.truncf %28 : vector<8x8xf32> to vector<8x8xbf16>
    %cst_25 = arith.constant dense<0.000000e+00> : vector<8x8xf32>
    %30 = tpu.matmul %25, %27, %cst_25 {dimension_numbers = #tpu.dot_dimension_numbers<[1], [1], [0], [0], [0, 0, 1, 0], [], []>} : vector<8x8xbf16>, vector<8x8xbf16>, vector<8x8xf32> -> vector<8x8xf32>
    %cst_26 = arith.constant 0.353553385 : f32
    %31 = vector.broadcast %cst_26 : f32 to vector<8x8xf32>
    %32 = arith.mulf %30, %31 : vector<8x8xf32>
    %33 = vector.broadcast %5 : vector<1x8xf32> to vector<8x8xf32>
    %34 = arith.addf %32, %33 : vector<8x8xf32>
    %cst_27 = arith.constant dense<0xFF800000> : vector<8xf32>
    %35 = vector.multi_reduction <maximumf>, %34, %cst_27 [1] : vector<8x8xf32> to vector<8xf32>
    %36 = vector.shape_cast %35 : vector<8xf32> to vector<8x1xf32>
    %37 = vector.broadcast %36 : vector<8x1xf32> to vector<8x8xf32>
    %38 = arith.subf %34, %37 : vector<8x8xf32>
    %39 = math.exp %38 : vector<8x8xf32>
    %cst_28 = arith.constant dense<0.000000e+00> : vector<8xf32>
    %40 = vector.multi_reduction <add>, %39, %cst_28 [1] : vector<8x8xf32> to vector<8xf32>
    %41 = vector.shape_cast %40 : vector<8xf32> to vector<8x1xf32>
    %42 = tpu.reciprocal %41 {approx = true} : vector<8x1xf32> -> vector<8x1xf32>
    %43 = vector.broadcast %42 : vector<8x1xf32> to vector<8x8xf32>
    %44 = arith.mulf %39, %43 : vector<8x8xf32>
    %45 = arith.truncf %44 : vector<8x8xf32> to vector<8x8xbf16>
    %cst_29 = arith.constant dense<0.000000e+00> : vector<8x8xf32>
    %46 = tpu.matmul %45, %29, %cst_29 {dimension_numbers = #tpu.dot_dimension_numbers<[1], [0], [0], [1], [0, 0, 1, 1], [], []>} : vector<8x8xbf16>, vector<8x8xbf16>, vector<8x8xf32> -> vector<8x8xf32>
    %47 = vector.extract_strided_slice %17 {offsets = [0, 8], sizes = [8, 8], strides = [1, 1]} : vector<8x16xf32> to vector<8x8xf32>
    %48 = arith.truncf %47 : vector<8x8xf32> to vector<8x8xbf16>
    %49 = vector.extract_strided_slice %22 {offsets = [0, 8], sizes = [8, 8], strides = [1, 1]} : vector<8x16xf32> to vector<8x8xf32>
    %50 = arith.truncf %49 : vector<8x8xf32> to vector<8x8xbf16>
    %51 = vector.extract_strided_slice %23 {offsets = [0, 8], sizes = [8, 8], strides = [1, 1]} : vector<8x16xf32> to vector<8x8xf32>
    %52 = arith.truncf %51 : vector<8x8xf32> to vector<8x8xbf16>
    %cst_30 = arith.constant dense<0.000000e+00> : vector<8x8xf32>
    %53 = tpu.matmul %48, %50, %cst_30 {dimension_numbers = #tpu.dot_dimension_numbers<[1], [1], [0], [0], [0, 0, 1, 0], [], []>} : vector<8x8xbf16>, vector<8x8xbf16>, vector<8x8xf32> -> vector<8x8xf32>
    %cst_31 = arith.constant 0.353553385 : f32
    %54 = vector.broadcast %cst_31 : f32 to vector<8x8xf32>
    %55 = arith.mulf %53, %54 : vector<8x8xf32>
    %56 = vector.broadcast %5 : vector<1x8xf32> to vector<8x8xf32>
    %57 = arith.addf %55, %56 : vector<8x8xf32>
    %cst_32 = arith.constant dense<0xFF800000> : vector<8xf32>
    %58 = vector.multi_reduction <maximumf>, %57, %cst_32 [1] : vector<8x8xf32> to vector<8xf32>
    %59 = vector.shape_cast %58 : vector<8xf32> to vector<8x1xf32>
    %60 = vector.broadcast %59 : vector<8x1xf32> to vector<8x8xf32>
    %61 = arith.subf %57, %60 : vector<8x8xf32>
    %62 = math.exp %61 : vector<8x8xf32>
    %cst_33 = arith.constant dense<0.000000e+00> : vector<8xf32>
    %63 = vector.multi_reduction <add>, %62, %cst_33 [1] : vector<8x8xf32> to vector<8xf32>
    %64 = vector.shape_cast %63 : vector<8xf32> to vector<8x1xf32>
    %65 = tpu.reciprocal %64 {approx = true} : vector<8x1xf32> -> vector<8x1xf32>
    %66 = vector.broadcast %65 : vector<8x1xf32> to vector<8x8xf32>
    %67 = arith.mulf %62, %66 : vector<8x8xf32>
    %68 = arith.truncf %67 : vector<8x8xf32> to vector<8x8xbf16>
    %cst_34 = arith.constant dense<0.000000e+00> : vector<8x8xf32>
    %69 = tpu.matmul %68, %52, %cst_34 {dimension_numbers = #tpu.dot_dimension_numbers<[1], [0], [0], [1], [0, 0, 1, 1], [], []>} : vector<8x8xbf16>, vector<8x8xbf16>, vector<8x8xf32> -> vector<8x8xf32>
    %70 = tpu.concatenate %46, %69 in 1 : vector<8x8xf32>, vector<8x8xf32> -> vector<8x16xf32>
    %71 = arith.truncf %70 : vector<8x16xf32> to vector<8x16xbf16>
    %cst_35 = arith.constant dense<0.000000e+00> : vector<8x32xf32>
    %72 = tpu.matmul %71, %10, %cst_35 {dimension_numbers = #tpu.dot_dimension_numbers<[1], [0], [0], [1], [0, 0, 1, 1], [], []>} : vector<8x16xbf16>, vector<16x32xbf16>, vector<8x32xf32> -> vector<8x32xf32>
    %73 = vector.broadcast %11 : vector<1x32xf32> to vector<8x32xf32>
    %74 = arith.addf %72, %73 : vector<8x32xf32>
    %75 = arith.addf %74, %1 : vector<8x32xf32>
    %cst_36 = arith.constant dense<0.000000e+00> : vector<8xf32>
    %76 = vector.multi_reduction <add>, %75, %cst_36 [1] : vector<8x32xf32> to vector<8xf32>
    %77 = vector.shape_cast %76 : vector<8xf32> to vector<8x1xf32>
    %cst_37 = arith.constant 3.200000e+01 : f32
    %78 = vector.broadcast %cst_37 : f32 to vector<8x1xf32>
    %79 = arith.divf %77, %78 : vector<8x1xf32>
    %80 = vector.broadcast %79 : vector<8x1xf32> to vector<8x32xf32>
    %81 = arith.subf %75, %80 : vector<8x32xf32>
    %82 = arith.mulf %81, %81 : vector<8x32xf32>
    %cst_38 = arith.constant dense<0.000000e+00> : vector<8xf32>
    %83 = vector.multi_reduction <add>, %82, %cst_38 [1] : vector<8x32xf32> to vector<8xf32>
    %84 = vector.shape_cast %83 : vector<8xf32> to vector<8x1xf32>
    %cst_39 = arith.constant 3.200000e+01 : f32
    %85 = vector.broadcast %cst_39 : f32 to vector<8x1xf32>
    %86 = arith.divf %84, %85 : vector<8x1xf32>
    %87 = vector.broadcast %79 : vector<8x1xf32> to vector<8x32xf32>
    %88 = arith.subf %75, %87 : vector<8x32xf32>
    %cst_40 = arith.constant 9.99999974E-6 : f32
    %89 = vector.broadcast %cst_40 : f32 to vector<8x1xf32>
    %90 = arith.addf %86, %89 : vector<8x1xf32>
    %91 = math.rsqrt %90 : vector<8x1xf32>
    %92 = vector.broadcast %91 : vector<8x1xf32> to vector<8x32xf32>
    %93 = arith.mulf %88, %92 : vector<8x32xf32>
    %94 = vector.broadcast %12 : vector<1x32xf32> to vector<8x32xf32>
    %95 = arith.mulf %93, %94 : vector<8x32xf32>
    %96 = vector.broadcast %13 : vector<1x32xf32> to vector<8x32xf32>
    %97 = arith.addf %95, %96 : vector<8x32xf32>
    %c0_41 = arith.constant 0 : index
    %c0_42 = arith.constant 0 : index
    %c0_43 = arith.constant 0 : index
    %98 = vector.load %arg4[%c0_41, %c0_42, %c0_43] : memref<1x1x16xf32, #tpu.memory_space<vmem>>, vector<1x1x16xf32>
    %99 = vector.shape_cast %98 : vector<1x1x16xf32> to vector<1x16xf32>
    %c0_44 = arith.constant 0 : index
    %c0_45 = arith.constant 0 : index
    %100 = vector.load %arg13[%c0_44, %c0_45] : memref<32x16xbf16, #tpu.memory_space<vmem>>, vector<32x16xbf16>
    %c0_46 = arith.constant 0 : index
    %c0_47 = arith.constant 0 : index
    %101 = vector.load %arg14[%c0_46, %c0_47] : memref<1x16xf32, #tpu.memory_space<vmem>>, vector<1x16xf32>
    %c0_48 = arith.constant 0 : index
    %c0_49 = arith.constant 0 : index
    %102 = vector.load %arg15[%c0_48, %c0_49] : memref<32x32xbf16, #tpu.memory_space<vmem>>, vector<32x32xbf16>
    %c0_50 = arith.constant 0 : index
    %c0_51 = arith.constant 0 : index
    %103 = vector.load %arg16[%c0_50, %c0_51] : memref<1x32xf32, #tpu.memory_space<vmem>>, vector<1x32xf32>
    %c0_52 = arith.constant 0 : index
    %c0_53 = arith.constant 0 : index
    %104 = vector.load %arg17[%c0_52, %c0_53] : memref<16x32xbf16, #tpu.memory_space<vmem>>, vector<16x32xbf16>
    %c0_54 = arith.constant 0 : index
    %c0_55 = arith.constant 0 : index
    %105 = vector.load %arg18[%c0_54, %c0_55] : memref<1x32xf32, #tpu.memory_space<vmem>>, vector<1x32xf32>
    %c0_56 = arith.constant 0 : index
    %c0_57 = arith.constant 0 : index
    %106 = vector.load %arg19[%c0_56, %c0_57] : memref<1x32xf32, #tpu.memory_space<vmem>>, vector<1x32xf32>
    %c0_58 = arith.constant 0 : index
    %c0_59 = arith.constant 0 : index
    %107 = vector.load %arg20[%c0_58, %c0_59] : memref<1x32xf32, #tpu.memory_space<vmem>>, vector<1x32xf32>
    %108 = arith.truncf %97 : vector<8x32xf32> to vector<8x32xbf16>
    %cst_60 = arith.constant dense<0.000000e+00> : vector<8x16xf32>
    %109 = tpu.matmul %108, %100, %cst_60 {dimension_numbers = #tpu.dot_dimension_numbers<[1], [0], [0], [1], [0, 0, 1, 1], [], []>} : vector<8x32xbf16>, vector<32x16xbf16>, vector<8x16xf32> -> vector<8x16xf32>
    %110 = vector.broadcast %101 : vector<1x16xf32> to vector<8x16xf32>
    %111 = arith.addf %109, %110 : vector<8x16xf32>
    %112 = arith.truncf %3 : vector<16x32xf32> to vector<16x32xbf16>
    %cst_61 = arith.constant dense<0.000000e+00> : vector<16x32xf32>
    %113 = tpu.matmul %112, %102, %cst_61 {dimension_numbers = #tpu.dot_dimension_numbers<[1], [0], [0], [1], [0, 0, 1, 1], [], []>} : vector<16x32xbf16>, vector<32x32xbf16>, vector<16x32xf32> -> vector<16x32xf32>
    %114 = vector.broadcast %103 : vector<1x32xf32> to vector<16x32xf32>
    %115 = arith.addf %113, %114 : vector<16x32xf32>
    %116 = vector.extract_strided_slice %115 {offsets = [0, 0], sizes = [16, 16], strides = [1, 1]} : vector<16x32xf32> to vector<16x16xf32>
    %117 = vector.extract_strided_slice %115 {offsets = [0, 16], sizes = [16, 16], strides = [1, 1]} : vector<16x32xf32> to vector<16x16xf32>
    %118 = vector.extract_strided_slice %111 {offsets = [0, 0], sizes = [8, 8], strides = [1, 1]} : vector<8x16xf32> to vector<8x8xf32>
    %119 = arith.truncf %118 : vector<8x8xf32> to vector<8x8xbf16>
    %120 = vector.extract_strided_slice %116 {offsets = [0, 0], sizes = [16, 8], strides = [1, 1]} : vector<16x16xf32> to vector<16x8xf32>
    %121 = arith.truncf %120 : vector<16x8xf32> to vector<16x8xbf16>
    %122 = vector.extract_strided_slice %117 {offsets = [0, 0], sizes = [16, 8], strides = [1, 1]} : vector<16x16xf32> to vector<16x8xf32>
    %123 = arith.truncf %122 : vector<16x8xf32> to vector<16x8xbf16>
    %cst_62 = arith.constant dense<0.000000e+00> : vector<8x16xf32>
    %124 = tpu.matmul %119, %121, %cst_62 {dimension_numbers = #tpu.dot_dimension_numbers<[1], [1], [0], [0], [0, 0, 1, 0], [], []>} : vector<8x8xbf16>, vector<16x8xbf16>, vector<8x16xf32> -> vector<8x16xf32>
    %cst_63 = arith.constant 0.353553385 : f32
    %125 = vector.broadcast %cst_63 : f32 to vector<8x16xf32>
    %126 = arith.mulf %124, %125 : vector<8x16xf32>
    %127 = vector.broadcast %99 : vector<1x16xf32> to vector<8x16xf32>
    %128 = arith.addf %126, %127 : vector<8x16xf32>
    %cst_64 = arith.constant dense<0xFF800000> : vector<8xf32>
    %129 = vector.multi_reduction <maximumf>, %128, %cst_64 [1] : vector<8x16xf32> to vector<8xf32>
    %130 = vector.shape_cast %129 : vector<8xf32> to vector<8x1xf32>
    %131 = vector.broadcast %130 : vector<8x1xf32> to vector<8x16xf32>
    %132 = arith.subf %128, %131 : vector<8x16xf32>
    %133 = math.exp %132 : vector<8x16xf32>
    %cst_65 = arith.constant dense<0.000000e+00> : vector<8xf32>
    %134 = vector.multi_reduction <add>, %133, %cst_65 [1] : vector<8x16xf32> to vector<8xf32>
    %135 = vector.shape_cast %134 : vector<8xf32> to vector<8x1xf32>
    %136 = tpu.reciprocal %135 {approx = true} : vector<8x1xf32> -> vector<8x1xf32>
    %137 = vector.broadcast %136 : vector<8x1xf32> to vector<8x16xf32>
    %138 = arith.mulf %133, %137 : vector<8x16xf32>
    %139 = arith.truncf %138 : vector<8x16xf32> to vector<8x16xbf16>
    %cst_66 = arith.constant dense<0.000000e+00> : vector<8x8xf32>
    %140 = tpu.matmul %139, %123, %cst_66 {dimension_numbers = #tpu.dot_dimension_numbers<[1], [0], [0], [1], [0, 0, 1, 1], [], []>} : vector<8x16xbf16>, vector<16x8xbf16>, vector<8x8xf32> -> vector<8x8xf32>
    %141 = vector.extract_strided_slice %111 {offsets = [0, 8], sizes = [8, 8], strides = [1, 1]} : vector<8x16xf32> to vector<8x8xf32>
    %142 = arith.truncf %141 : vector<8x8xf32> to vector<8x8xbf16>
    %143 = vector.extract_strided_slice %116 {offsets = [0, 8], sizes = [16, 8], strides = [1, 1]} : vector<16x16xf32> to vector<16x8xf32>
    %144 = arith.truncf %143 : vector<16x8xf32> to vector<16x8xbf16>
    %145 = vector.extract_strided_slice %117 {offsets = [0, 8], sizes = [16, 8], strides = [1, 1]} : vector<16x16xf32> to vector<16x8xf32>
    %146 = arith.truncf %145 : vector<16x8xf32> to vector<16x8xbf16>
    %cst_67 = arith.constant dense<0.000000e+00> : vector<8x16xf32>
    %147 = tpu.matmul %142, %144, %cst_67 {dimension_numbers = #tpu.dot_dimension_numbers<[1], [1], [0], [0], [0, 0, 1, 0], [], []>} : vector<8x8xbf16>, vector<16x8xbf16>, vector<8x16xf32> -> vector<8x16xf32>
    %cst_68 = arith.constant 0.353553385 : f32
    %148 = vector.broadcast %cst_68 : f32 to vector<8x16xf32>
    %149 = arith.mulf %147, %148 : vector<8x16xf32>
    %150 = vector.broadcast %99 : vector<1x16xf32> to vector<8x16xf32>
    %151 = arith.addf %149, %150 : vector<8x16xf32>
    %cst_69 = arith.constant dense<0xFF800000> : vector<8xf32>
    %152 = vector.multi_reduction <maximumf>, %151, %cst_69 [1] : vector<8x16xf32> to vector<8xf32>
    %153 = vector.shape_cast %152 : vector<8xf32> to vector<8x1xf32>
    %154 = vector.broadcast %153 : vector<8x1xf32> to vector<8x16xf32>
    %155 = arith.subf %151, %154 : vector<8x16xf32>
    %156 = math.exp %155 : vector<8x16xf32>
    %cst_70 = arith.constant dense<0.000000e+00> : vector<8xf32>
    %157 = vector.multi_reduction <add>, %156, %cst_70 [1] : vector<8x16xf32> to vector<8xf32>
    %158 = vector.shape_cast %157 : vector<8xf32> to vector<8x1xf32>
    %159 = tpu.reciprocal %158 {approx = true} : vector<8x1xf32> -> vector<8x1xf32>
    %160 = vector.broadcast %159 : vector<8x1xf32> to vector<8x16xf32>
    %161 = arith.mulf %156, %160 : vector<8x16xf32>
    %162 = arith.truncf %161 : vector<8x16xf32> to vector<8x16xbf16>
    %cst_71 = arith.constant dense<0.000000e+00> : vector<8x8xf32>
    %163 = tpu.matmul %162, %146, %cst_71 {dimension_numbers = #tpu.dot_dimension_numbers<[1], [0], [0], [1], [0, 0, 1, 1], [], []>} : vector<8x16xbf16>, vector<16x8xbf16>, vector<8x8xf32> -> vector<8x8xf32>
    %164 = tpu.concatenate %140, %163 in 1 : vector<8x8xf32>, vector<8x8xf32> -> vector<8x16xf32>
    %165 = arith.truncf %164 : vector<8x16xf32> to vector<8x16xbf16>
    %cst_72 = arith.constant dense<0.000000e+00> : vector<8x32xf32>
    %166 = tpu.matmul %165, %104, %cst_72 {dimension_numbers = #tpu.dot_dimension_numbers<[1], [0], [0], [1], [0, 0, 1, 1], [], []>} : vector<8x16xbf16>, vector<16x32xbf16>, vector<8x32xf32> -> vector<8x32xf32>
    %167 = vector.broadcast %105 : vector<1x32xf32> to vector<8x32xf32>
    %168 = arith.addf %166, %167 : vector<8x32xf32>
    %169 = arith.addf %168, %97 : vector<8x32xf32>
    %cst_73 = arith.constant dense<0.000000e+00> : vector<8xf32>
    %170 = vector.multi_reduction <add>, %169, %cst_73 [1] : vector<8x32xf32> to vector<8xf32>
    %171 = vector.shape_cast %170 : vector<8xf32> to vector<8x1xf32>
    %cst_74 = arith.constant 3.200000e+01 : f32
    %172 = vector.broadcast %cst_74 : f32 to vector<8x1xf32>
    %173 = arith.divf %171, %172 : vector<8x1xf32>
    %174 = vector.broadcast %173 : vector<8x1xf32> to vector<8x32xf32>
    %175 = arith.subf %169, %174 : vector<8x32xf32>
    %176 = arith.mulf %175, %175 : vector<8x32xf32>
    %cst_75 = arith.constant dense<0.000000e+00> : vector<8xf32>
    %177 = vector.multi_reduction <add>, %176, %cst_75 [1] : vector<8x32xf32> to vector<8xf32>
    %178 = vector.shape_cast %177 : vector<8xf32> to vector<8x1xf32>
    %cst_76 = arith.constant 3.200000e+01 : f32
    %179 = vector.broadcast %cst_76 : f32 to vector<8x1xf32>
    %180 = arith.divf %178, %179 : vector<8x1xf32>
    %181 = vector.broadcast %173 : vector<8x1xf32> to vector<8x32xf32>
    %182 = arith.subf %169, %181 : vector<8x32xf32>
    %cst_77 = arith.constant 9.99999974E-6 : f32
    %183 = vector.broadcast %cst_77 : f32 to vector<8x1xf32>
    %184 = arith.addf %180, %183 : vector<8x1xf32>
    %185 = math.rsqrt %184 : vector<8x1xf32>
    %186 = vector.broadcast %185 : vector<8x1xf32> to vector<8x32xf32>
    %187 = arith.mulf %182, %186 : vector<8x32xf32>
    %188 = vector.broadcast %106 : vector<1x32xf32> to vector<8x32xf32>
    %189 = arith.mulf %187, %188 : vector<8x32xf32>
    %190 = vector.broadcast %107 : vector<1x32xf32> to vector<8x32xf32>
    %191 = arith.addf %189, %190 : vector<8x32xf32>
    %192 = arith.truncf %191 : vector<8x32xf32> to vector<8x32xbf16>
    %c0_78 = arith.constant 0 : index
    %c0_79 = arith.constant 0 : index
    %193 = vector.load %arg21[%c0_78, %c0_79] : memref<32x64xbf16, #tpu.memory_space<vmem>>, vector<32x64xbf16>
    %cst_80 = arith.constant dense<0.000000e+00> : vector<8x64xf32>
    %194 = tpu.matmul %192, %193, %cst_80 {dimension_numbers = #tpu.dot_dimension_numbers<[1], [0], [0], [1], [0, 0, 1, 1], [], []>} : vector<8x32xbf16>, vector<32x64xbf16>, vector<8x64xf32> -> vector<8x64xf32>
    %c0_81 = arith.constant 0 : index
    %c0_82 = arith.constant 0 : index
    %195 = vector.load %arg22[%c0_81, %c0_82] : memref<1x64xf32, #tpu.memory_space<vmem>>, vector<1x64xf32>
    %196 = vector.broadcast %195 : vector<1x64xf32> to vector<8x64xf32>
    %197 = arith.addf %194, %196 : vector<8x64xf32>
    %cst_83 = arith.constant 0.000000e+00 : f32
    %198 = vector.broadcast %cst_83 : f32 to vector<8x64xf32>
    %199 = arith.maximumf %197, %198 : vector<8x64xf32>
    %200 = arith.truncf %199 : vector<8x64xf32> to vector<8x64xbf16>
    %c0_84 = arith.constant 0 : index
    %c0_85 = arith.constant 0 : index
    %201 = vector.load %arg23[%c0_84, %c0_85] : memref<64x32xbf16, #tpu.memory_space<vmem>>, vector<64x32xbf16>
    %cst_86 = arith.constant dense<0.000000e+00> : vector<8x32xf32>
    %202 = tpu.matmul %200, %201, %cst_86 {dimension_numbers = #tpu.dot_dimension_numbers<[1], [0], [0], [1], [0, 0, 1, 1], [], []>} : vector<8x64xbf16>, vector<64x32xbf16>, vector<8x32xf32> -> vector<8x32xf32>
    %c0_87 = arith.constant 0 : index
    %c0_88 = arith.constant 0 : index
    %203 = vector.load %arg24[%c0_87, %c0_88] : memref<1x32xf32, #tpu.memory_space<vmem>>, vector<1x32xf32>
    %204 = vector.broadcast %203 : vector<1x32xf32> to vector<8x32xf32>
    %205 = arith.addf %202, %204 : vector<8x32xf32>
    %206 = arith.addf %205, %191 : vector<8x32xf32>
    %c0_89 = arith.constant 0 : index
    %c0_90 = arith.constant 0 : index
    %207 = vector.load %arg25[%c0_89, %c0_90] : memref<1x32xf32, #tpu.memory_space<vmem>>, vector<1x32xf32>
    %c0_91 = arith.constant 0 : index
    %c0_92 = arith.constant 0 : index
    %208 = vector.load %arg26[%c0_91, %c0_92] : memref<1x32xf32, #tpu.memory_space<vmem>>, vector<1x32xf32>
    %cst_93 = arith.constant dense<0.000000e+00> : vector<8xf32>
    %209 = vector.multi_reduction <add>, %206, %cst_93 [1] : vector<8x32xf32> to vector<8xf32>
    %210 = vector.shape_cast %209 : vector<8xf32> to vector<8x1xf32>
    %cst_94 = arith.constant 3.200000e+01 : f32
    %211 = vector.broadcast %cst_94 : f32 to vector<8x1xf32>
    %212 = arith.divf %210, %211 : vector<8x1xf32>
    %213 = vector.broadcast %212 : vector<8x1xf32> to vector<8x32xf32>
    %214 = arith.subf %206, %213 : vector<8x32xf32>
    %215 = arith.mulf %214, %214 : vector<8x32xf32>
    %cst_95 = arith.constant dense<0.000000e+00> : vector<8xf32>
    %216 = vector.multi_reduction <add>, %215, %cst_95 [1] : vector<8x32xf32> to vector<8xf32>
    %217 = vector.shape_cast %216 : vector<8xf32> to vector<8x1xf32>
    %cst_96 = arith.constant 3.200000e+01 : f32
    %218 = vector.broadcast %cst_96 : f32 to vector<8x1xf32>
    %219 = arith.divf %217, %218 : vector<8x1xf32>
    %220 = vector.broadcast %212 : vector<8x1xf32> to vector<8x32xf32>
    %221 = arith.subf %206, %220 : vector<8x32xf32>
    %cst_97 = arith.constant 9.99999974E-6 : f32
    %222 = vector.broadcast %cst_97 : f32 to vector<8x1xf32>
    %223 = arith.addf %219, %222 : vector<8x1xf32>
    %224 = math.rsqrt %223 : vector<8x1xf32>
    %225 = vector.broadcast %224 : vector<8x1xf32> to vector<8x32xf32>
    %226 = arith.mulf %221, %225 : vector<8x32xf32>
    %227 = vector.broadcast %207 : vector<1x32xf32> to vector<8x32xf32>
    %228 = arith.mulf %226, %227 : vector<8x32xf32>
    %229 = vector.broadcast %208 : vector<1x32xf32> to vector<8x32xf32>
    %230 = arith.addf %228, %229 : vector<8x32xf32>
    %c0_98 = arith.constant 0 : index
    %c0_99 = arith.constant 0 : index
    %c0_100 = arith.constant 0 : index
    %231 = vector.load %arg27[%c0_98, %c0_99, %c0_100] : memref<1x8x32xf32, #tpu.memory_space<vmem>>, vector<1x8x32xf32>
    %232 = vector.shape_cast %231 : vector<1x8x32xf32> to vector<8x32xf32>
    %233 = vector.shape_cast %230 : vector<8x32xf32> to vector<1x8x32xf32>
    tpu.vector_store %arg27[%c0_98, %c0_99, %c0_100], %233 {strides = array<i32>} : memref<1x8x32xf32, #tpu.memory_space<vmem>>, vector<1x8x32xf32>,
    return
  }
  func.func @transform_0(%arg0: i32) -> (i32, i32, i32) {
    %c0_i32 = arith.constant 0 : i32
    %c0_i32_0 = arith.constant 0 : i32
    %c0_i32_1 = arith.constant 0 : i32
    return %arg0, %c0_i32, %c0_i32_0 : i32, i32, i32
  }
  func.func @transform_1(%arg0: i32) -> (i32, i32, i32) {
    %c0_i32 = arith.constant 0 : i32
    %c0_i32_0 = arith.constant 0 : i32
    %c0_i32_1 = arith.constant 0 : i32
    return %arg0, %c0_i32, %c0_i32_0 : i32, i32, i32
  }
  func.func @transform_2(%arg0: i32) -> (i32, i32, i32) {
    %c0_i32 = arith.constant 0 : i32
    %c0_i32_0 = arith.constant 0 : i32
    %c0_i32_1 = arith.constant 0 : i32
    return %arg0, %c0_i32, %c0_i32_0 : i32, i32, i32
  }
  func.func @transform_3(%arg0: i32) -> (i32, i32, i32) {
    %c0_i32 = arith.constant 0 : i32
    %c0_i32_0 = arith.constant 0 : i32
    %c0_i32_1 = arith.constant 0 : i32
    return %arg0, %c0_i32, %c0_i32_0 : i32, i32, i32
  }
  func.func @transform_4(%arg0: i32) -> (i32, i32) {
    %c0_i32 = arith.constant 0 : i32
    %c0_i32_0 = arith.constant 0 : i32
    %c0_i32_1 = arith.constant 0 : i32
    return %c0_i32, %c0_i32_0 : i32, i32
  }
  func.func @transform_5(%arg0: i32) -> (i32, i32) {
    %c0_i32 = arith.constant 0 : i32
    %c0_i32_0 = arith.constant 0 : i32
    %c0_i32_1 = arith.constant 0 : i32
    return %c0_i32, %c0_i32_0 : i32, i32
  }
  func.func @transform_6(%arg0: i32) -> (i32, i32) {
    %c0_i32 = arith.constant 0 : i32
    %c0_i32_0 = arith.constant 0 : i32
    %c0_i32_1 = arith.constant 0 : i32
    return %c0_i32, %c0_i32_0 : i32, i32
  }
  func.func @transform_7(%arg0: i32) -> (i32, i32) {
    %c0_i32 = arith.constant 0 : i32
    %c0_i32_0 = arith.constant 0 : i32
    %c0_i32_1 = arith.constant 0 : i32
    return %c0_i32, %c0_i32_0 : i32, i32
  }
  func.func @transform_8(%arg0: i32) -> (i32, i32) {
    %c0_i32 = arith.constant 0 : i32
    %c0_i32_0 = arith.constant 0 : i32
    %c0_i32_1 = arith.constant 0 : i32
    return %c0_i32, %c0_i32_0 : i32, i32
  }
  func.func @transform_9(%arg0: i32) -> (i32, i32) {
    %c0_i32 = arith.constant 0 : i32
    %c0_i32_0 = arith.constant 0 : i32
    %c0_i32_1 = arith.constant 0 : i32
    return %c0_i32, %c0_i32_0 : i32, i32
  }
  func.func @transform_10(%arg0: i32) -> (i32, i32) {
    %c0_i32 = arith.constant 0 : i32
    %c0_i32_0 = arith.constant 0 : i32
    %c0_i32_1 = arith.constant 0 : i32
    return %c0_i32, %c0_i32_0 : i32, i32
  }
  func.func @transform_11(%arg0: i32) -> (i32, i32) {
    %c0_i32 = arith.constant 0 : i32
    %c0_i32_0 = arith.constant 0 : i32
    %c0_i32_1 = arith.constant 0 : i32
    return %c0_i32, %c0_i32_0 : i32, i32
  }
  func.func @transform_12(%arg0: i32) -> (i32, i32) {
    %c0_i32 = arith.constant 0 : i32
    %c0_i32_0 = arith.constant 0 : i32
    %c0_i32_1 = arith.constant 0 : i32
    return %c0_i32, %c0_i32_0 : i32, i32
  }
  func.func @transform_13(%arg0: i32) -> (i32, i32) {
    %c0_i32 = arith.constant 0 : i32
    %c0_i32_0 = arith.constant 0 : i32
    %c0_i32_1 = arith.constant 0 : i32
    return %c0_i32, %c0_i32_0 : i32, i32
  }
  func.func @transform_14(%arg0: i32) -> (i32, i32) {
    %c0_i32 = arith.constant 0 : i32
    %c0_i32_0 = arith.constant 0 : i32
    %c0_i32_1 = arith.constant 0 : i32
    return %c0_i32, %c0_i32_0 : i32, i32
  }
  func.func @transform_15(%arg0: i32) -> (i32, i32) {
    %c0_i32 = arith.constant 0 : i32
    %c0_i32_0 = arith.constant 0 : i32
    %c0_i32_1 = arith.constant 0 : i32
    return %c0_i32, %c0_i32_0 : i32, i32
  }
  func.func @transform_16(%arg0: i32) -> (i32, i32) {
    %c0_i32 = arith.constant 0 : i32
    %c0_i32_0 = arith.constant 0 : i32
    %c0_i32_1 = arith.constant 0 : i32
    return %c0_i32, %c0_i32_0 : i32, i32
  }
  func.func @transform_17(%arg0: i32) -> (i32, i32) {
    %c0_i32 = arith.constant 0 : i32
    %c0_i32_0 = arith.constant 0 : i32
    %c0_i32_1 = arith.constant 0 : i32
    return %c0_i32, %c0_i32_0 : i32, i32
  }
  func.func @transform_18(%arg0: i32) -> (i32, i32) {
    %c0_i32 = arith.constant 0 : i32
    %c0_i32_0 = arith.constant 0 : i32
    %c0_i32_1 = arith.constant 0 : i32
    return %c0_i32, %c0_i32_0 : i32, i32
  }
  func.func @transform_19(%arg0: i32) -> (i32, i32) {
    %c0_i32 = arith.constant 0 : i32
    %c0_i32_0 = arith.constant 0 : i32
    %c0_i32_1 = arith.constant 0 : i32
    return %c0_i32, %c0_i32_0 : i32, i32
  }
  func.func @transform_20(%arg0: i32) -> (i32, i32) {
    %c0_i32 = arith.constant 0 : i32
    %c0_i32_0 = arith.constant 0 : i32
    %c0_i32_1 = arith.constant 0 : i32
    return %c0_i32, %c0_i32_0 : i32, i32
  }
  func.func @transform_21(%arg0: i32) -> (i32, i32) {
    %c0_i32 = arith.constant 0 : i32
    %c0_i32_0 = arith.constant 0 : i32
    %c0_i32_1 = arith.constant 0 : i32
    return %c0_i32, %c0_i32_0 : i32, i32
  }
  func.func @transform_22(%arg0: i32) -> (i32, i32) {
    %c0_i32 = arith.constant 0 : i32
    %c0_i32_0 = arith.constant 0 : i32
    %c0_i32_1 = arith.constant 0 : i32
    return %c0_i32, %c0_i32_0 : i32, i32
  }
  func.func @transform_23(%arg0: i32) -> (i32, i32) {
    %c0_i32 = arith.constant 0 : i32
    %c0_i32_0 = arith.constant 0 : i32
    %c0_i32_1 = arith.constant 0 : i32
    return %c0_i32, %c0_i32_0 : i32, i32
  }
  func.func @transform_24(%arg0: i32) -> (i32, i32) {
    %c0_i32 = arith.constant 0 : i32
    %c0_i32_0 = arith.constant 0 : i32
    %c0_i32_1 = arith.constant 0 : i32
    return %c0_i32, %c0_i32_0 : i32, i32
  }
  func.func @transform_25(%arg0: i32) -> (i32, i32) {
    %c0_i32 = arith.constant 0 : i32
    %c0_i32_0 = arith.constant 0 : i32
    %c0_i32_1 = arith.constant 0 : i32
    return %c0_i32, %c0_i32_0 : i32, i32
  }
  func.func @transform_26(%arg0: i32) -> (i32, i32, i32) {
    %c0_i32 = arith.constant 0 : i32
    %c0_i32_0 = arith.constant 0 : i32
    %c0_i32_1 = arith.constant 0 : i32
    return %arg0, %c0_i32, %c0_i32_0 : i32, i32, i32
  }
}

</mosaic_0001>

<llo_original>
// kernel: decoder_layer.1
$region0: #{decoder_layer.1}
  #allocation0 [shape = 'u32[]', space=smem, size = 0x4, offset = 0x4, fixed_abs, tag = 'smem constant byte address 0x4 - core index']
  #allocation1 [shape = 'u32[144,128]{1,0:T(1,128)}', space=vmem, size = 0x12000, scoped, tag = 'internal scratch']
  %s0 = inlined_call_operand.vmem [shape: f32[2,8,32], index: 0, kind: input, shape index: {}]
  %s1 = inlined_call_operand.vmem [shape: f32[2,16,32], index: 1, kind: input, shape index: {}]
  %s2 = inlined_call_operand.vmem [shape: f32[2,1,8], index: 2, kind: input, shape index: {}]
  %s3 = inlined_call_operand.vmem [shape: f32[2,1,16], index: 3, kind: input, shape index: {}]
  %s4 = inlined_call_operand.vmem [shape: bf16[32,16], index: 4, kind: input, shape index: {}]
  %s5 = inlined_call_operand.vmem [shape: f32[1,16], index: 5, kind: input, shape index: {}]
  %s6 = inlined_call_operand.vmem [shape: bf16[32,32], index: 6, kind: input, shape index: {}]
  %s7 = inlined_call_operand.vmem [shape: f32[1,32], index: 7, kind: input, shape index: {}]
  %s8 = inlined_call_operand.vmem [shape: bf16[16,32], index: 8, kind: input, shape index: {}]
  %s9 = inlined_call_operand.vmem [shape: f32[1,32], index: 9, kind: input, shape index: {}]
  %s10 = inlined_call_operand.vmem [shape: f32[1,32], index: 10, kind: input, shape index: {}]
  %s11 = inlined_call_operand.vmem [shape: f32[1,32], index: 11, kind: input, shape index: {}]
  %s12 = inlined_call_operand.vmem [shape: bf16[32,16], index: 12, kind: input, shape index: {}]
  %s13 = inlined_call_operand.hbm [shape: f32[1,16], index: 13, kind: input, shape index: {}]
  %s14 = inlined_call_operand.vmem [shape: bf16[32,32], index: 14, kind: input, shape index: {}]
  %s15 = inlined_call_operand.hbm [shape: f32[1,32], index: 15, kind: input, shape index: {}]
  %s16 = inlined_call_operand.hbm [shape: bf16[16,32], index: 16, kind: input, shape index: {}]
  %s17 = inlined_call_operand.hbm [shape: f32[1,32], index: 17, kind: input, shape index: {}]
  %s18 = inlined_call_operand.hbm [shape: f32[1,32], index: 18, kind: input, shape index: {}]
  %s19 = inlined_call_operand.hbm [shape: f32[1,32], index: 19, kind: input, shape index: {}]
  %s20 = inlined_call_operand.vmem [shape: bf16[32,64], index: 20, kind: input, shape index: {}]
  %s21 = inlined_call_operand.hbm [shape: f32[1,64], index: 21, kind: input, shape index: {}]
  %s22 = inlined_call_operand.vmem [shape: bf16[64,32], index: 22, kind: input, shape index: {}]
  %s23 = inlined_call_operand.hbm [shape: f32[1,32], index: 23, kind: input, shape index: {}]
  %s24 = inlined_call_operand.vmem [shape: f32[1,32], index: 24, kind: input, shape index: {}]
  %s25 = inlined_call_operand.vmem [shape: f32[1,32], index: 25, kind: input, shape index: {}]
  %s26 = inlined_call_operand.hbm [shape: f32[2,8,32], index: 26, kind: output, shape index: {}]
  %s27 = sld [smem:[#allocation0]]
  $region169: #{decoder_layer.1} parent=0
    _
  %s29 = ssub.s32 1, %s27
  %s30 = scalar_select 0, %s29, %s27
  $region1: #{decoder_layer.1} parent=0
    #allocation2 [shape = 'u8[512]{0}', space=vmem, size = 0x400, scoped, tag = 'input window, operand 13, single buffered']
    #allocation3 [shape = 's32[2]{0}', space=sflag, size = 0x8, scoped, tag = 'scoped memory for decoder_layer.1']
    #allocation4 [shape = 's32[2]{0}', space=sflag, size = 0x8, scoped, tag = 'scoped memory for decoder_layer.1']
    #allocation5 [shape = 'u8[512]{0}', space=vmem, size = 0x400, scoped, tag = 'input window, operand 15, single buffered']
    #allocation6 [shape = 's32[1]{0}', space=sflag, size = 0x4, scoped, tag = 'scoped memory for decoder_layer.1']
    #allocation7 [shape = 'u8[4096]{0}', space=vmem, size = 0x1000, scoped, tag = 'input window, operand 16, single buffered']
    #allocation8 [shape = 'u8[512]{0}', space=vmem, size = 0x400, scoped, tag = 'input window, operand 17, single buffered']
    #allocation9 [shape = 's32[1]{0}', space=sflag, size = 0x4, scoped, tag = 'scoped memory for decoder_layer.1']
    #allocation10 [shape = 'u8[512]{0}', space=vmem, size = 0x400, scoped, tag = 'input window, operand 18, single buffered']
    #allocation11 [shape = 'u8[512]{0}', space=vmem, size = 0x400, scoped, tag = 'input window, operand 19, single buffered']
    #allocation12 [shape = 's32[1]{0}', space=sflag, size = 0x4, scoped, tag = 'scoped memory for decoder_layer.1']
    #allocation13 [shape = 'u8[512]{0}', space=vmem, size = 0x400, scoped, tag = 'input window, operand 21, single buffered']
    #allocation14 [shape = 'u8[512]{0}', space=vmem, size = 0x400, scoped, tag = 'input window, operand 23, single buffered']
    #allocation15 [shape = 's32[1]{0}', space=sflag, size = 0x4, scoped, tag = 'scoped memory for decoder_layer.1']
    #allocation16 [shape = 'u8[8192]{0}', space=vmem, size = 0x2000, scoped, tag = 'output window, operand 0']
    %31 = vsyncpa [#allocation3], 0
    %32 = vsyncpa [#allocation6], 0
    %33 = vsyncpa [#allocation9], 0
    %34 = vsyncpa [#allocation12], 0
    %35 = vsyncpa [#allocation15], 0
    %36 = vsyncpa [#allocation4], 0
    %s37 = scalar_lea.sflag [#allocation4], 1
    %38 = vsyncpa %s37, 0
    loop: start=0, step=1, limit=4
    $region2: #{decoder_layer.1} parent=1 // loop_pre_header
      _
    $region3: #{decoder_layer.1} parent=1 // loop_header
      %s40 = sphi 0, %s44
      %p41 = scmp.ge.s32.totalorder %s40, 4
      %s50 = sphi 0, %s52
      %s53 = sphi 0, %s50
      %s54 = sphi 0, %s53
      %s70 = sphi 0, %s54
      %s76 = sphi 0, %s78
      %s79 = sphi 0, %s76
      %s80 = sphi 0, %s79
      %s96 = sphi 0, %s80
      %s102 = sphi 0, %s104
      %s105 = sphi 0, %s102
      %s106 = sphi 0, %s105
      %s122 = sphi 0, %s106
      %s128 = sphi 0, %s130
      %s131 = sphi 0, %s128
      %s132 = sphi 0, %s131
      %s148 = sphi 0, %s132
      %s152 = sphi 0, %s152
      %s154 = sphi 0, %s152
      %s155 = sphi 0, %s154
      %s169 = sphi 0, %s155
      %s173 = sphi 0, %s173
      %s175 = sphi 0, %s173
      %s176 = sphi 0, %s175
      %s190 = sphi 0, %s176
      %s194 = sphi 0, %s194
      %s196 = sphi 0, %s194
      %s197 = sphi 0, %s196
      %s211 = sphi 0, %s197
      %s215 = sphi 0, %s215
      %s217 = sphi 0, %s215
      %s218 = sphi 0, %s217
      %s232 = sphi 0, %s218
      %s236 = sphi 0, %s236
      %s238 = sphi 0, %s236
      %s239 = sphi 0, %s238
      %s253 = sphi 0, %s239
      %s257 = sphi 0, %s257
      %s259 = sphi 0, %s257
      %s260 = sphi 0, %s259
      %s274 = sphi 0, %s260
      %s278 = sphi 0, %s278
      %s280 = sphi 0, %s278
      %s281 = sphi 0, %s280
      %s295 = sphi 0, %s281
      %s299 = sphi 0, %s299
      %s301 = sphi 0, %s299
      %s302 = sphi 0, %s301
      %s316 = sphi 0, %s302
      %s320 = sphi 0, %s320
      %s322 = sphi 0, %s320
      %s323 = sphi 0, %s322
      %s337 = sphi 0, %s323
      %s341 = sphi 0, %s341
      %s343 = sphi 0, %s341
      %s344 = sphi 0, %s343
      %s358 = sphi 0, %s344
      %s362 = sphi 0, %s362
      %s364 = sphi 0, %s362
      %s365 = sphi 0, %s364
      %s379 = sphi 0, %s365
      %s383 = sphi 0, %s383
      %s385 = sphi 0, %s383
      %s386 = sphi 0, %s385
      %s400 = sphi 0, %s386
      %s404 = sphi 0, %s404
      %s406 = sphi 0, %s404
      %s407 = sphi 0, %s406
      %s421 = sphi 0, %s407
      %s425 = sphi 0, %s425
      %s427 = sphi 0, %s425
      %s428 = sphi 0, %s427
      %s442 = sphi 0, %s428
      %s446 = sphi 0, %s446
      %s448 = sphi 0, %s446
      %s449 = sphi 0, %s448
      %s463 = sphi 0, %s449
      %s467 = sphi 0, %s467
      %s469 = sphi 0, %s467
      %s470 = sphi 0, %s469
      %s484 = sphi 0, %s470
      %s488 = sphi 0, %s488
      %s490 = sphi 0, %s488
      %s491 = sphi 0, %s490
      %s505 = sphi 0, %s491
      %s509 = sphi 0, %s509
      %s511 = sphi 0, %s509
      %s512 = sphi 0, %s511
      %s526 = sphi 0, %s512
      %s530 = sphi 0, %s530
      %s532 = sphi 0, %s530
      %s533 = sphi 0, %s532
      %s547 = sphi 0, %s533
      %s551 = sphi 0, %s551
      %s553 = sphi 0, %s551
      %s554 = sphi 0, %s553
      %s568 = sphi 0, %s554
      %s572 = sphi 0, %s572
      %s574 = sphi 0, %s572
      %s575 = sphi 0, %s574
      %s589 = sphi 0, %s575
      %s593 = sphi 0, %s593
      %s595 = sphi 0, %s593
      %s596 = sphi 0, %s595
      %s610 = sphi 0, %s596
      %s616 = sphi 0, %s618
      %s619 = sphi 0, %s616
      %s620 = sphi 0, %s619
      %s636 = sphi 0, %s620
    $region4: #{decoder_layer.1} parent=1 // loop_header_branch
      %43 = sbr.rel (%p41) target = $region8
    $region5: #{decoder_layer.1} parent=1 // loop_body
      %s45 = ssub.s32 %s40, 1
      %s46 = ssub.s32 %s40, 2
      %s47 = sadd.s32 %s40, 1
      %s48 = ssub.s32 %s40, %s47
      %p49 = scmp.eq.s32.totalorder %s48, 0
      %s51 = sadd.s32 %s50, 1
      %s52 = scalar_select %p49, %s50, %s51
      %p55 = pneg %p49
      %p56 = scmp.eq.s32.totalorder %s40, 1
      %p57 = por %p55, %p56
      %p58 = scmp.ne.s32.totalorder %s50, %s53
      %p59 = scmp.eq.s32.totalorder %s40, 0
      %p60 = por %p58, %p59
      %p61 = scmp.ne.s32.totalorder %s50, %s53
      %p62 = scmp.eq.s32.totalorder %s45, 1
      %p63 = por %p61, %p62
      %p64 = scmp.ne.s32.totalorder %s53, %s54
      %p65 = scmp.eq.s32.totalorder %s45, 0
      %p66 = por %p64, %p65
      %p67 = scmp.ne.s32.totalorder %s53, %s54
      %p68 = scmp.eq.s32.totalorder %s46, 1
      %p69 = por %p67, %p68
      %p71 = scmp.ne.s32.totalorder %s54, %s70
      %p72 = scmp.eq.s32.totalorder %s46, 0
      %p73 = por %p71, %p72
      %s74 = ssub.s32 %s40, %s47
      %p75 = scmp.eq.s32.totalorder %s74, 0
      %s77 = sadd.s32 %s76, 1
      %s78 = scalar_select %p75, %s76, %s77
      %p81 = pneg %p75
      %p82 = scmp.eq.s32.totalorder %s40, 1
      %p83 = por %p81, %p82
      %p84 = scmp.ne.s32.totalorder %s76, %s79
      %p85 = scmp.eq.s32.totalorder %s40, 0
      %p86 = por %p84, %p85
      %p87 = scmp.ne.s32.totalorder %s76, %s79
      %p88 = scmp.eq.s32.totalorder %s45, 1
      %p89 = por %p87, %p88
      %p90 = scmp.ne.s32.totalorder %s79, %s80
      %p91 = scmp.eq.s32.totalorder %s45, 0
      %p92 = por %p90, %p91
      %p93 = scmp.ne.s32.totalorder %s79, %s80
      %p94 = scmp.eq.s32.totalorder %s46, 1
      %p95 = por %p93, %p94
      %p97 = scmp.ne.s32.totalorder %s80, %s96
      %p98 = scmp.eq.s32.totalorder %s46, 0
      %p99 = por %p97, %p98
      %s100 = ssub.s32 %s40, %s47
      %p101 = scmp.eq.s32.totalorder %s100, 0
      %s103 = sadd.s32 %s102, 1
      %s104 = scalar_select %p101, %s102, %s103
      %p107 = pneg %p101
      %p108 = scmp.eq.s32.totalorder %s40, 1
      %p109 = por %p107, %p108
      %p110 = scmp.ne.s32.totalorder %s102, %s105
      %p111 = scmp.eq.s32.totalorder %s40, 0
      %p112 = por %p110, %p111
      %p113 = scmp.ne.s32.totalorder %s102, %s105
      %p114 = scmp.eq.s32.totalorder %s45, 1
      %p115 = por %p113, %p114
      %p116 = scmp.ne.s32.totalorder %s105, %s106
      %p117 = scmp.eq.s32.totalorder %s45, 0
      %p118 = por %p116, %p117
      %p119 = scmp.ne.s32.totalorder %s105, %s106
      %p120 = scmp.eq.s32.totalorder %s46, 1
      %p121 = por %p119, %p120
      %p123 = scmp.ne.s32.totalorder %s106, %s122
      %p124 = scmp.eq.s32.totalorder %s46, 0
      %p125 = por %p123, %p124
      %s126 = ssub.s32 %s40, %s47
      %p127 = scmp.eq.s32.totalorder %s126, 0
      %s129 = sadd.s32 %s128, 1
      %s130 = scalar_select %p127, %s128, %s129
      %p133 = pneg %p127
      %p134 = scmp.eq.s32.totalorder %s40, 1
      %p135 = por %p133, %p134
      %p136 = scmp.ne.s32.totalorder %s128, %s131
      %p137 = scmp.eq.s32.totalorder %s40, 0
      %p138 = por %p136, %p137
      %p139 = scmp.ne.s32.totalorder %s128, %s131
      %p140 = scmp.eq.s32.totalorder %s45, 1
      %p141 = por %p139, %p140
      %p142 = scmp.ne.s32.totalorder %s131, %s132
      %p143 = scmp.eq.s32.totalorder %s45, 0
      %p144 = por %p142, %p143
      %p145 = scmp.ne.s32.totalorder %s131, %s132
      %p146 = scmp.eq.s32.totalorder %s46, 1
      %p147 = por %p145, %p146
      %p149 = scmp.ne.s32.totalorder %s132, %s148
      %p150 = scmp.eq.s32.totalorder %s46, 0
      %p151 = por %p149, %p150
      %s153 = sadd.s32 %s152, 1
      %p156 = scmp.eq.s32.totalorder %s40, 1
      %p157 = scmp.ne.s32.totalorder %s152, %s154
      %p158 = scmp.eq.s32.totalorder %s40, 0
      %p159 = por %p157, %p158
      %p160 = scmp.ne.s32.totalorder %s152, %s154
      %p161 = scmp.eq.s32.totalorder %s45, 1
      %p162 = por %p160, %p161
      %p163 = scmp.ne.s32.totalorder %s154, %s155
      %p164 = scmp.eq.s32.totalorder %s45, 0
      %p165 = por %p163, %p164
      %p166 = scmp.ne.s32.totalorder %s154, %s155
      %p167 = scmp.eq.s32.totalorder %s46, 1
      %p168 = por %p166, %p167
      %p170 = scmp.ne.s32.totalorder %s155, %s169
      %p171 = scmp.eq.s32.totalorder %s46, 0
      %p172 = por %p170, %p171
      %s174 = sadd.s32 %s173, 1
      %p177 = scmp.eq.s32.totalorder %s40, 1
      %p178 = scmp.ne.s32.totalorder %s173, %s175
      %p179 = scmp.eq.s32.totalorder %s40, 0
      %p180 = por %p178, %p179
      %p181 = scmp.ne.s32.totalorder %s173, %s175
      %p182 = scmp.eq.s32.totalorder %s45, 1
      %p183 = por %p181, %p182
      %p184 = scmp.ne.s32.totalorder %s175, %s176
      %p185 = scmp.eq.s32.totalorder %s45, 0
      %p186 = por %p184, %p185
      %p187 = scmp.ne.s32.totalorder %s175, %s176
      %p188 = scmp.eq.s32.totalorder %s46, 1
      %p189 = por %p187, %p188
      %p191 = scmp.ne.s32.totalorder %s176, %s190
      %p192 = scmp.eq.s32.totalorder %s46, 0
      %p193 = por %p191, %p192
      %s195 = sadd.s32 %s194, 1
      %p198 = scmp.eq.s32.totalorder %s40, 1
      %p199 = scmp.ne.s32.totalorder %s194, %s196
      %p200 = scmp.eq.s32.totalorder %s40, 0
      %p201 = por %p199, %p200
      %p202 = scmp.ne.s32.totalorder %s194, %s196
      %p203 = scmp.eq.s32.totalorder %s45, 1
      %p204 = por %p202, %p203
      %p205 = scmp.ne.s32.totalorder %s196, %s197
      %p206 = scmp.eq.s32.totalorder %s45, 0
      %p207 = por %p205, %p206
      %p208 = scmp.ne.s32.totalorder %s196, %s197
      %p209 = scmp.eq.s32.totalorder %s46, 1
      %p210 = por %p208, %p209
      %p212 = scmp.ne.s32.totalorder %s197, %s211
      %p213 = scmp.eq.s32.totalorder %s46, 0
      %p214 = por %p212, %p213
      %s216 = sadd.s32 %s215, 1
      %p219 = scmp.eq.s32.totalorder %s40, 1
      %p220 = scmp.ne.s32.totalorder %s215, %s217
      %p221 = scmp.eq.s32.totalorder %s40, 0
      %p222 = por %p220, %p221
      %p223 = scmp.ne.s32.totalorder %s215, %s217
      %p224 = scmp.eq.s32.totalorder %s45, 1
      %p225 = por %p223, %p224
      %p226 = scmp.ne.s32.totalorder %s217, %s218
      %p227 = scmp.eq.s32.totalorder %s45, 0
      %p228 = por %p226, %p227
      %p229 = scmp.ne.s32.totalorder %s217, %s218
      %p230 = scmp.eq.s32.totalorder %s46, 1
      %p231 = por %p229, %p230
      %p233 = scmp.ne.s32.totalorder %s218, %s232
      %p234 = scmp.eq.s32.totalorder %s46, 0
      %p235 = por %p233, %p234
      %s237 = sadd.s32 %s236, 1
      %p240 = scmp.eq.s32.totalorder %s40, 1
      %p241 = scmp.ne.s32.totalorder %s236, %s238
      %p242 = scmp.eq.s32.totalorder %s40, 0
      %p243 = por %p241, %p242
      %p244 = scmp.ne.s32.totalorder %s236, %s238
      %p245 = scmp.eq.s32.totalorder %s45, 1
      %p246 = por %p244, %p245
      %p247 = scmp.ne.s32.totalorder %s238, %s239
      %p248 = scmp.eq.s32.totalorder %s45, 0
      %p249 = por %p247, %p248
      %p250 = scmp.ne.s32.totalorder %s238, %s239
      %p251 = scmp.eq.s32.totalorder %s46, 1
      %p252 = por %p250, %p251
      %p254 = scmp.ne.s32.totalorder %s239, %s253
      %p255 = scmp.eq.s32.totalorder %s46, 0
      %p256 = por %p254, %p255
      %s258 = sadd.s32 %s257, 1
      %p261 = scmp.eq.s32.totalorder %s40, 1
      %p262 = scmp.ne.s32.totalorder %s257, %s259
      %p263 = scmp.eq.s32.totalorder %s40, 0
      %p264 = por %p262, %p263
      %p265 = scmp.ne.s32.totalorder %s257, %s259
      %p266 = scmp.eq.s32.totalorder %s45, 1
      %p267 = por %p265, %p266
      %p268 = scmp.ne.s32.totalorder %s259, %s260
      %p269 = scmp.eq.s32.totalorder %s45, 0
      %p270 = por %p268, %p269
      %p271 = scmp.ne.s32.totalorder %s259, %s260
      %p272 = scmp.eq.s32.totalorder %s46, 1
      %p273 = por %p271, %p272
      %p275 = scmp.ne.s32.totalorder %s260, %s274
      %p276 = scmp.eq.s32.totalorder %s46, 0
      %p277 = por %p275, %p276
      %s279 = sadd.s32 %s278, 1
      %p282 = scmp.eq.s32.totalorder %s40, 1
      %p283 = scmp.ne.s32.totalorder %s278, %s280
      %p284 = scmp.eq.s32.totalorder %s40, 0
      %p285 = por %p283, %p284
      %p286 = scmp.ne.s32.totalorder %s278, %s280
      %p287 = scmp.eq.s32.totalorder %s45, 1
      %p288 = por %p286, %p287
      %p289 = scmp.ne.s32.totalorder %s280, %s281
      %p290 = scmp.eq.s32.totalorder %s45, 0
      %p291 = por %p289, %p290
      %p292 = scmp.ne.s32.totalorder %s280, %s281
      %p293 = scmp.eq.s32.totalorder %s46, 1
      %p294 = por %p292, %p293
      %p296 = scmp.ne.s32.totalorder %s281, %s295
      %p297 = scmp.eq.s32.totalorder %s46, 0
      %p298 = por %p296, %p297
      %s300 = sadd.s32 %s299, 1
      %p303 = scmp.eq.s32.totalorder %s40, 1
      %p304 = scmp.ne.s32.totalorder %s299, %s301
      %p305 = scmp.eq.s32.totalorder %s40, 0
      %p306 = por %p304, %p305
      %p307 = scmp.ne.s32.totalorder %s299, %s301
      %p308 = scmp.eq.s32.totalorder %s45, 1
      %p309 = por %p307, %p308
      %p310 = scmp.ne.s32.totalorder %s301, %s302
      %p311 = scmp.eq.s32.totalorder %s45, 0
      %p312 = por %p310, %p311
      %p313 = scmp.ne.s32.totalorder %s301, %s302
      %p314 = scmp.eq.s32.totalorder %s46, 1
      %p315 = por %p313, %p314
      %p317 = scmp.ne.s32.totalorder %s302, %s316
      %p318 = scmp.eq.s32.totalorder %s46, 0
      %p319 = por %p317, %p318
      %s321 = sadd.s32 %s320, 1
      %p324 = scmp.eq.s32.totalorder %s40, 1
      %p325 = scmp.ne.s32.totalorder %s320, %s322
      %p326 = scmp.eq.s32.totalorder %s40, 0
      %p327 = por %p325, %p326
      %p328 = scmp.ne.s32.totalorder %s320, %s322
      %p329 = scmp.eq.s32.totalorder %s45, 1
      %p330 = por %p328, %p329
      %p331 = scmp.ne.s32.totalorder %s322, %s323
      %p332 = scmp.eq.s32.totalorder %s45, 0
      %p333 = por %p331, %p332
      %p334 = scmp.ne.s32.totalorder %s322, %s323
      %p335 = scmp.eq.s32.totalorder %s46, 1
      %p336 = por %p334, %p335
      %p338 = scmp.ne.s32.totalorder %s323, %s337
      %p339 = scmp.eq.s32.totalorder %s46, 0
      %p340 = por %p338, %p339
      %s342 = sadd.s32 %s341, 1
      %p345 = scmp.eq.s32.totalorder %s40, 1
      %p346 = scmp.ne.s32.totalorder %s341, %s343
      %p347 = scmp.eq.s32.totalorder %s40, 0
      %p348 = por %p346, %p347
      %p349 = scmp.ne.s32.totalorder %s341, %s343
      %p350 = scmp.eq.s32.totalorder %s45, 1
      %p351 = por %p349, %p350
      %p352 = scmp.ne.s32.totalorder %s343, %s344
      %p353 = scmp.eq.s32.totalorder %s45, 0
      %p354 = por %p352, %p353
      %p355 = scmp.ne.s32.totalorder %s343, %s344
      %p356 = scmp.eq.s32.totalorder %s46, 1
      %p357 = por %p355, %p356
      %p359 = scmp.ne.s32.totalorder %s344, %s358
      %p360 = scmp.eq.s32.totalorder %s46, 0
      %p361 = por %p359, %p360
      %s363 = sadd.s32 %s362, 1
      %p366 = scmp.eq.s32.totalorder %s40, 1
      %p367 = scmp.ne.s32.totalorder %s362, %s364
      %p368 = scmp.eq.s32.totalorder %s40, 0
      %p369 = por %p367, %p368
      %p370 = scmp.ne.s32.totalorder %s362, %s364
      %p371 = scmp.eq.s32.totalorder %s45, 1
      %p372 = por %p370, %p371
      %p373 = scmp.ne.s32.totalorder %s364, %s365
      %p374 = scmp.eq.s32.totalorder %s45, 0
      %p375 = por %p373, %p374
      %p376 = scmp.ne.s32.totalorder %s364, %s365
      %p377 = scmp.eq.s32.totalorder %s46, 1
      %p378 = por %p376, %p377
      %p380 = scmp.ne.s32.totalorder %s365, %s379
      %p381 = scmp.eq.s32.totalorder %s46, 0
      %p382 = por %p380, %p381
      %s384 = sadd.s32 %s383, 1
      %p387 = scmp.eq.s32.totalorder %s40, 1
      %p388 = scmp.ne.s32.totalorder %s383, %s385
      %p389 = scmp.eq.s32.totalorder %s40, 0
      %p390 = por %p388, %p389
      %p391 = scmp.ne.s32.totalorder %s383, %s385
      %p392 = scmp.eq.s32.totalorder %s45, 1
      %p393 = por %p391, %p392
      %p394 = scmp.ne.s32.totalorder %s385, %s386
      %p395 = scmp.eq.s32.totalorder %s45, 0
      %p396 = por %p394, %p395
      %p397 = scmp.ne.s32.totalorder %s385, %s386
      %p398 = scmp.eq.s32.totalorder %s46, 1
      %p399 = por %p397, %p398
      %p401 = scmp.ne.s32.totalorder %s386, %s400
      %p402 = scmp.eq.s32.totalorder %s46, 0
      %p403 = por %p401, %p402
      %s405 = sadd.s32 %s404, 1
      %p408 = scmp.eq.s32.totalorder %s40, 1
      %p409 = scmp.ne.s32.totalorder %s404, %s406
      %p410 = scmp.eq.s32.totalorder %s40, 0
      %p411 = por %p409, %p410
      %p412 = scmp.ne.s32.totalorder %s404, %s406
      %p413 = scmp.eq.s32.totalorder %s45, 1
      %p414 = por %p412, %p413
      %p415 = scmp.ne.s32.totalorder %s406, %s407
      %p416 = scmp.eq.s32.totalorder %s45, 0
      %p417 = por %p415, %p416
      %p418 = scmp.ne.s32.totalorder %s406, %s407
      %p419 = scmp.eq.s32.totalorder %s46, 1
      %p420 = por %p418, %p419
      %p422 = scmp.ne.s32.totalorder %s407, %s421
      %p423 = scmp.eq.s32.totalorder %s46, 0
      %p424 = por %p422, %p423
      %s426 = sadd.s32 %s425, 1
      %p429 = scmp.eq.s32.totalorder %s40, 1
      %p430 = scmp.ne.s32.totalorder %s425, %s427
      %p431 = scmp.eq.s32.totalorder %s40, 0
      %p432 = por %p430, %p431
      %p433 = scmp.ne.s32.totalorder %s425, %s427
      %p434 = scmp.eq.s32.totalorder %s45, 1
      %p435 = por %p433, %p434
      %p436 = scmp.ne.s32.totalorder %s427, %s428
      %p437 = scmp.eq.s32.totalorder %s45, 0
      %p438 = por %p436, %p437
      %p439 = scmp.ne.s32.totalorder %s427, %s428
      %p440 = scmp.eq.s32.totalorder %s46, 1
      %p441 = por %p439, %p440
      %p443 = scmp.ne.s32.totalorder %s428, %s442
      %p444 = scmp.eq.s32.totalorder %s46, 0
      %p445 = por %p443, %p444
      %s447 = sadd.s32 %s446, 1
      %p450 = scmp.eq.s32.totalorder %s40, 1
      %p451 = scmp.ne.s32.totalorder %s446, %s448
      %p452 = scmp.eq.s32.totalorder %s40, 0
      %p453 = por %p451, %p452
      %p454 = scmp.ne.s32.totalorder %s446, %s448
      %p455 = scmp.eq.s32.totalorder %s45, 1
      %p456 = por %p454, %p455
      %p457 = scmp.ne.s32.totalorder %s448, %s449
      %p458 = scmp.eq.s32.totalorder %s45, 0
      %p459 = por %p457, %p458
      %p460 = scmp.ne.s32.totalorder %s448, %s449
      %p461 = scmp.eq.s32.totalorder %s46, 1
      %p462 = por %p460, %p461
      %p464 = scmp.ne.s32.totalorder %s449, %s463
      %p465 = scmp.eq.s32.totalorder %s46, 0
      %p466 = por %p464, %p465
      %s468 = sadd.s32 %s467, 1
      %p471 = scmp.eq.s32.totalorder %s40, 1
      %p472 = scmp.ne.s32.totalorder %s467, %s469
      %p473 = scmp.eq.s32.totalorder %s40, 0
      %p474 = por %p472, %p473
      %p475 = scmp.ne.s32.totalorder %s467, %s469
      %p476 = scmp.eq.s32.totalorder %s45, 1
      %p477 = por %p475, %p476
      %p478 = scmp.ne.s32.totalorder %s469, %s470
      %p479 = scmp.eq.s32.totalorder %s45, 0
      %p480 = por %p478, %p479
      %p481 = scmp.ne.s32.totalorder %s469, %s470
      %p482 = scmp.eq.s32.totalorder %s46, 1
      %p483 = por %p481, %p482
      %p485 = scmp.ne.s32.totalorder %s470, %s484
      %p486 = scmp.eq.s32.totalorder %s46, 0
      %p487 = por %p485, %p486
      %s489 = sadd.s32 %s488, 1
      %p492 = scmp.eq.s32.totalorder %s40, 1
      %p493 = scmp.ne.s32.totalorder %s488, %s490
      %p494 = scmp.eq.s32.totalorder %s40, 0
      %p495 = por %p493, %p494
      %p496 = scmp.ne.s32.totalorder %s488, %s490
      %p497 = scmp.eq.s32.totalorder %s45, 1
      %p498 = por %p496, %p497
      %p499 = scmp.ne.s32.totalorder %s490, %s491
      %p500 = scmp.eq.s32.totalorder %s45, 0
      %p501 = por %p499, %p500
      %p502 = scmp.ne.s32.totalorder %s490, %s491
      %p503 = scmp.eq.s32.totalorder %s46, 1
      %p504 = por %p502, %p503
      %p506 = scmp.ne.s32.totalorder %s491, %s505
      %p507 = scmp.eq.s32.totalorder %s46, 0
      %p508 = por %p506, %p507
      %s510 = sadd.s32 %s509, 1
      %p513 = scmp.eq.s32.totalorder %s40, 1
      %p514 = scmp.ne.s32.totalorder %s509, %s511
      %p515 = scmp.eq.s32.totalorder %s40, 0
      %p516 = por %p514, %p515
      %p517 = scmp.ne.s32.totalorder %s509, %s511
      %p518 = scmp.eq.s32.totalorder %s45, 1
      %p519 = por %p517, %p518
      %p520 = scmp.ne.s32.totalorder %s511, %s512
      %p521 = scmp.eq.s32.totalorder %s45, 0
      %p522 = por %p520, %p521
      %p523 = scmp.ne.s32.totalorder %s511, %s512
      %p524 = scmp.eq.s32.totalorder %s46, 1
      %p525 = por %p523, %p524
      %p527 = scmp.ne.s32.totalorder %s512, %s526
      %p528 = scmp.eq.s32.totalorder %s46, 0
      %p529 = por %p527, %p528
      %s531 = sadd.s32 %s530, 1
      %p534 = scmp.eq.s32.totalorder %s40, 1
      %p535 = scmp.ne.s32.totalorder %s530, %s532
      %p536 = scmp.eq.s32.totalorder %s40, 0
      %p537 = por %p535, %p536
      %p538 = scmp.ne.s32.totalorder %s530, %s532
      %p539 = scmp.eq.s32.totalorder %s45, 1
      %p540 = por %p538, %p539
      %p541 = scmp.ne.s32.totalorder %s532, %s533
      %p542 = scmp.eq.s32.totalorder %s45, 0
      %p543 = por %p541, %p542
      %p544 = scmp.ne.s32.totalorder %s532, %s533
      %p545 = scmp.eq.s32.totalorder %s46, 1
      %p546 = por %p544, %p545
      %p548 = scmp.ne.s32.totalorder %s533, %s547
      %p549 = scmp.eq.s32.totalorder %s46, 0
      %p550 = por %p548, %p549
      %s552 = sadd.s32 %s551, 1
      %p555 = scmp.eq.s32.totalorder %s40, 1
      %p556 = scmp.ne.s32.totalorder %s551, %s553
      %p557 = scmp.eq.s32.totalorder %s40, 0
      %p558 = por %p556, %p557
      %p559 = scmp.ne.s32.totalorder %s551, %s553
      %p560 = scmp.eq.s32.totalorder %s45, 1
      %p561 = por %p559, %p560
      %p562 = scmp.ne.s32.totalorder %s553, %s554
      %p563 = scmp.eq.s32.totalorder %s45, 0
      %p564 = por %p562, %p563
      %p565 = scmp.ne.s32.totalorder %s553, %s554
      %p566 = scmp.eq.s32.totalorder %s46, 1
      %p567 = por %p565, %p566
      %p569 = scmp.ne.s32.totalorder %s554, %s568
      %p570 = scmp.eq.s32.totalorder %s46, 0
      %p571 = por %p569, %p570
      %s573 = sadd.s32 %s572, 1
      %p576 = scmp.eq.s32.totalorder %s40, 1
      %p577 = scmp.ne.s32.totalorder %s572, %s574
      %p578 = scmp.eq.s32.totalorder %s40, 0
      %p579 = por %p577, %p578
      %p580 = scmp.ne.s32.totalorder %s572, %s574
      %p581 = scmp.eq.s32.totalorder %s45, 1
      %p582 = por %p580, %p581
      %p583 = scmp.ne.s32.totalorder %s574, %s575
      %p584 = scmp.eq.s32.totalorder %s45, 0
      %p585 = por %p583, %p584
      %p586 = scmp.ne.s32.totalorder %s574, %s575
      %p587 = scmp.eq.s32.totalorder %s46, 1
      %p588 = por %p586, %p587
      %p590 = scmp.ne.s32.totalorder %s575, %s589
      %p591 = scmp.eq.s32.totalorder %s46, 0
      %p592 = por %p590, %p591
      %s594 = sadd.s32 %s593, 1
      %p597 = scmp.eq.s32.totalorder %s40, 1
      %p598 = scmp.ne.s32.totalorder %s593, %s595
      %p599 = scmp.eq.s32.totalorder %s40, 0
      %p600 = por %p598, %p599
      %p601 = scmp.ne.s32.totalorder %s593, %s595
      %p602 = scmp.eq.s32.totalorder %s45, 1
      %p603 = por %p601, %p602
      %p604 = scmp.ne.s32.totalorder %s595, %s596
      %p605 = scmp.eq.s32.totalorder %s45, 0
      %p606 = por %p604, %p605
      %p607 = scmp.ne.s32.totalorder %s595, %s596
      %p608 = scmp.eq.s32.totalorder %s46, 1
      %p609 = por %p607, %p608
      %p611 = scmp.ne.s32.totalorder %s596, %s610
      %p612 = scmp.eq.s32.totalorder %s46, 0
      %p613 = por %p611, %p612
      %s614 = ssub.s32 %s40, %s47
      %p615 = scmp.eq.s32.totalorder %s614, 0
      %s617 = sadd.s32 %s616, 1
      %s618 = scalar_select %p615, %s616, %s617
      %p621 = pneg %p615
      %p622 = scmp.eq.s32.totalorder %s40, 1
      %p623 = por %p621, %p622
      %p624 = scmp.ne.s32.totalorder %s616, %s619
      %p625 = scmp.eq.s32.totalorder %s40, 0
      %p626 = por %p624, %p625
      %p627 = scmp.ne.s32.totalorder %s616, %s619
      %p628 = scmp.eq.s32.totalorder %s45, 1
      %p629 = por %p627, %p628
      %p630 = scmp.ne.s32.totalorder %s619, %s620
      %p631 = scmp.eq.s32.totalorder %s45, 0
      %p632 = por %p630, %p631
      %p633 = scmp.ne.s32.totalorder %s619, %s620
      %p634 = scmp.eq.s32.totalorder %s46, 1
      %p635 = por %p633, %p634
      %p637 = scmp.ne.s32.totalorder %s620, %s636
      %p638 = scmp.eq.s32.totalorder %s46, 0
      %p639 = por %p637, %p638
      %p640 = scmp.le.s32.totalorder 1, %s40
      %p641 = scmp.lt.s32.totalorder %s40, 3
      %p642 = pnand %p640, %p641
      %p643 = pneg %p642
      // Predicated region
      $region9: #{decoder_layer.1} parent=5 // pred_check
        _
      $region10: #{decoder_layer.1} parent=5 // pred_check_branch
        %645 = sbr.rel (%p642) target = $region12
      $region11: #{decoder_layer.1} parent=5 // pred_region
        %s646 = ssub.s32 %s40, 1
        // Predicated region
        $region13: #{decoder_layer.1} parent=11 // pred_check
          %p647 = pneg %p165
        $region14: #{decoder_layer.1} parent=11 // pred_check_branch
          %649 = sbr.rel (%p647) target = $region16
        $region15: #{decoder_layer.1} parent=11 // pred_region
          _
        $region16: #{decoder_layer.1} parent=11 // pred_fallthru
          _
        // Predicated region
        $region17: #{decoder_layer.1} parent=11 // pred_check
          %p650 = pneg %p186
        $region18: #{decoder_layer.1} parent=11 // pred_check_branch
          %652 = sbr.rel (%p650) target = $region20
        $region19: #{decoder_layer.1} parent=11 // pred_region
          _
        $region20: #{decoder_layer.1} parent=11 // pred_fallthru
          _
        // Predicated region
        $region21: #{decoder_layer.1} parent=11 // pred_check
          %p653 = pneg %p207
        $region22: #{decoder_layer.1} parent=11 // pred_check_branch
          %655 = sbr.rel (%p653) target = $region24
        $region23: #{decoder_layer.1} parent=11 // pred_region
          _
        $region24: #{decoder_layer.1} parent=11 // pred_fallthru
          _
        // Predicated region
        $region25: #{decoder_layer.1} parent=11 // pred_check
          %p656 = pneg %p228
        $region26: #{decoder_layer.1} parent=11 // pred_check_branch
          %658 = sbr.rel (%p656) target = $region28
        $region27: #{decoder_layer.1} parent=11 // pred_region
          _
        $region28: #{decoder_layer.1} parent=11 // pred_fallthru
          _
        // Predicated region
        $region29: #{decoder_layer.1} parent=11 // pred_check
          %p659 = pneg %p249
        $region30: #{decoder_layer.1} parent=11 // pred_check_branch
          %661 = sbr.rel (%p659) target = $region32
        $region31: #{decoder_layer.1} parent=11 // pred_region
          _
        $region32: #{decoder_layer.1} parent=11 // pred_fallthru
          _
        // Predicated region
        $region33: #{decoder_layer.1} parent=11 // pred_check
          %p662 = pneg %p270
        $region34: #{decoder_layer.1} parent=11 // pred_check_branch
          %664 = sbr.rel (%p662) target = $region36
        $region35: #{decoder_layer.1} parent=11 // pred_region
          _
        $region36: #{decoder_layer.1} parent=11 // pred_fallthru
          _
        // Predicated region
        $region37: #{decoder_layer.1} parent=11 // pred_check
          %p665 = pneg %p291
        $region38: #{decoder_layer.1} parent=11 // pred_check_branch
          %667 = sbr.rel (%p665) target = $region40
        $region39: #{decoder_layer.1} parent=11 // pred_region
          _
        $region40: #{decoder_layer.1} parent=11 // pred_fallthru
          _
        // Predicated region
        $region41: #{decoder_layer.1} parent=11 // pred_check
          %p668 = pneg %p312
        $region42: #{decoder_layer.1} parent=11 // pred_check_branch
          %670 = sbr.rel (%p668) target = $region44
        $region43: #{decoder_layer.1} parent=11 // pred_region
          _
        $region44: #{decoder_layer.1} parent=11 // pred_fallthru
          _
        // Predicated region
        $region45: #{decoder_layer.1} parent=11 // pred_check
          %p671 = pneg %p333
        $region46: #{decoder_layer.1} parent=11 // pred_check_branch
          %673 = sbr.rel (%p671) target = $region48
        $region47: #{decoder_layer.1} parent=11 // pred_region
          _
        $region48: #{decoder_layer.1} parent=11 // pred_fallthru
          _
        // Predicated region
        $region49: #{decoder_layer.1} parent=11 // pred_check
          %p674 = pneg %p354
        $region50: #{decoder_layer.1} parent=11 // pred_check_branch
          %676 = sbr.rel (%p674) target = $region52
        $region51: #{decoder_layer.1} parent=11 // pred_region
          %s678 = ssub.s32 16, 16
          %679 = vsyncadd [#allocation3], %s678
          %s681 = sshll.u32 [#allocation2], 4
          %s682 = int_to_ptr.vmem [resolvable:$true] %s681
          %684 = dma.hbm_to_vmem [thread:$0]  %s13, 16, %s682, [#allocation3]
        $region52: #{decoder_layer.1} parent=11 // pred_fallthru
          _
        // Predicated region
        $region53: #{decoder_layer.1} parent=11 // pred_check
          %p685 = pneg %p375
        $region54: #{decoder_layer.1} parent=11 // pred_check_branch
          %687 = sbr.rel (%p685) target = $region56
        $region55: #{decoder_layer.1} parent=11 // pred_region
          _
        $region56: #{decoder_layer.1} parent=11 // pred_fallthru
          _
        // Predicated region
        $region57: #{decoder_layer.1} parent=11 // pred_check
          %p688 = pneg %p396
        $region58: #{decoder_layer.1} parent=11 // pred_check_branch
          %690 = sbr.rel (%p688) target = $region60
        $region59: #{decoder_layer.1} parent=11 // pred_region
          %s692 = ssub.s32 16, 16
          %693 = vsyncadd [#allocation6], %s692
          %s695 = sshll.u32 [#allocation5], 4
          %s696 = int_to_ptr.vmem [resolvable:$true] %s695
          %698 = dma.hbm_to_vmem [thread:$0]  %s15, 16, %s696, [#allocation6]
        $region60: #{decoder_layer.1} parent=11 // pred_fallthru
          _
        // Predicated region
        $region61: #{decoder_layer.1} parent=11 // pred_check
          %p699 = pneg %p417
        $region62: #{decoder_layer.1} parent=11 // pred_check_branch
          %701 = sbr.rel (%p699) target = $region64
        $region63: #{decoder_layer.1} parent=11 // pred_region
          %s703 = ssub.s32 128, 128
          %704 = vsyncadd [#allocation6], %s703
          %s705 = sshll.u32 [#allocation7], 4
          %s706 = int_to_ptr.vmem [resolvable:$true] %s705
          %711 = dma.hbm_to_vmem [thread:$0]  %s16, 128, %s706, [#allocation6], 64, 64, 4
        $region64: #{decoder_layer.1} parent=11 // pred_fallthru
          _
        // Predicated region
        $region65: #{decoder_layer.1} parent=11 // pred_check
          %p712 = pneg %p438
        $region66: #{decoder_layer.1} parent=11 // pred_check_branch
          %714 = sbr.rel (%p712) target = $region68
        $region67: #{decoder_layer.1} parent=11 // pred_region
          %s716 = ssub.s32 16, 16
          %717 = vsyncadd [#allocation9], %s716
          %s719 = sshll.u32 [#allocation8], 4
          %s720 = int_to_ptr.vmem [resolvable:$true] %s719
          %722 = dma.hbm_to_vmem [thread:$0]  %s17, 16, %s720, [#allocation9]
        $region68: #{decoder_layer.1} parent=11 // pred_fallthru
          _
        // Predicated region
        $region69: #{decoder_layer.1} parent=11 // pred_check
          %p723 = pneg %p459
        $region70: #{decoder_layer.1} parent=11 // pred_check_branch
          %725 = sbr.rel (%p723) target = $region72
        $region71: #{decoder_layer.1} parent=11 // pred_region
          %s727 = ssub.s32 16, 16
          %728 = vsyncadd [#allocation9], %s727
          %s730 = sshll.u32 [#allocation10], 4
          %s731 = int_to_ptr.vmem [resolvable:$true] %s730
          %733 = dma.hbm_to_vmem [thread:$0]  %s18, 16, %s731, [#allocation9]
        $region72: #{decoder_layer.1} parent=11 // pred_fallthru
          _
        // Predicated region
        $region73: #{decoder_layer.1} parent=11 // pred_check
          %p734 = pneg %p480
        $region74: #{decoder_layer.1} parent=11 // pred_check_branch
          %736 = sbr.rel (%p734) target = $region76
        $region75: #{decoder_layer.1} parent=11 // pred_region
          %s738 = ssub.s32 16, 16
          %739 = vsyncadd [#allocation12], %s738
          %s741 = sshll.u32 [#allocation11], 4
          %s742 = int_to_ptr.vmem [resolvable:$true] %s741
          %744 = dma.hbm_to_vmem [thread:$0]  %s19, 16, %s742, [#allocation12]
        $region76: #{decoder_layer.1} parent=11 // pred_fallthru
          _
        // Predicated region
        $region77: #{decoder_layer.1} parent=11 // pred_check
          %p745 = pneg %p501
        $region78: #{decoder_layer.1} parent=11 // pred_check_branch
          %747 = sbr.rel (%p745) target = $region80
        $region79: #{decoder_layer.1} parent=11 // pred_region
          _
        $region80: #{decoder_layer.1} parent=11 // pred_fallthru
          _
        // Predicated region
        $region81: #{decoder_layer.1} parent=11 // pred_check
          %p748 = pneg %p522
        $region82: #{decoder_layer.1} parent=11 // pred_check_branch
          %750 = sbr.rel (%p748) target = $region84
        $region83: #{decoder_layer.1} parent=11 // pred_region
          %s752 = ssub.s32 16, 16
          %753 = vsyncadd [#allocation12], %s752
          %s755 = sshll.u32 [#allocation13], 4
          %s756 = int_to_ptr.vmem [resolvable:$true] %s755
          %758 = dma.hbm_to_vmem [thread:$0]  %s21, 16, %s756, [#allocation12]
        $region84: #{decoder_layer.1} parent=11 // pred_fallthru
          _
        // Predicated region
        $region85: #{decoder_layer.1} parent=11 // pred_check
          %p759 = pneg %p543
        $region86: #{decoder_layer.1} parent=11 // pred_check_branch
          %761 = sbr.rel (%p759) target = $region88
        $region87: #{decoder_layer.1} parent=11 // pred_region
          _
        $region88: #{decoder_layer.1} parent=11 // pred_fallthru
          _
        // Predicated region
        $region89: #{decoder_layer.1} parent=11 // pred_check
          %p762 = pneg %p564
        $region90: #{decoder_layer.1} parent=11 // pred_check_branch
          %764 = sbr.rel (%p762) target = $region92
        $region91: #{decoder_layer.1} parent=11 // pred_region
          %s766 = ssub.s32 16, 16
          %767 = vsyncadd [#allocation15], %s766
          %s769 = sshll.u32 [#allocation14], 4
          %s770 = int_to_ptr.vmem [resolvable:$true] %s769
          %772 = dma.hbm_to_vmem [thread:$0]  %s23, 16, %s770, [#allocation15]
        $region92: #{decoder_layer.1} parent=11 // pred_fallthru
          _
        // Predicated region
        $region93: #{decoder_layer.1} parent=11 // pred_check
          %p773 = pneg %p585
        $region94: #{decoder_layer.1} parent=11 // pred_check_branch
          %775 = sbr.rel (%p773) target = $region96
        $region95: #{decoder_layer.1} parent=11 // pred_region
          _
        $region96: #{decoder_layer.1} parent=11 // pred_fallthru
          _
        // Predicated region
        $region97: #{decoder_layer.1} parent=11 // pred_check
          %p776 = pneg %p606
        $region98: #{decoder_layer.1} parent=11 // pred_check_branch
          %778 = sbr.rel (%p776) target = $region100
        $region99: #{decoder_layer.1} parent=11 // pred_region
          _
        $region100: #{decoder_layer.1} parent=11 // pred_fallthru
          _
      $region12: #{decoder_layer.1} parent=5 // pred_fallthru
        _
      %p779 = scmp.lt.s32.totalorder %s40, 2
      // Predicated region
      $region101: #{decoder_layer.1} parent=5 // pred_check
        %p780 = pneg %p779
      $region102: #{decoder_layer.1} parent=5 // pred_check_branch
        %782 = sbr.rel (%p780) target = $region104
      $region103: #{decoder_layer.1} parent=5 // pred_region
        // Predicated region
        $region105: #{decoder_layer.1} parent=103 // pred_check
          %p783 = pneg %p60
        $region106: #{decoder_layer.1} parent=103 // pred_check_branch
          %785 = sbr.rel (%p783) target = $region108
        $region107: #{decoder_layer.1} parent=103 // pred_region
          %p786 = scmp.lt.s32.totalorder %s40, 1
          %s787 = scalar_select %p786, %s40, 1
          %s788 = smul.addr %s787, 8
          %s789 = scalar_lea.vmem %s0, %s788
        $region108: #{decoder_layer.1} parent=103 // pred_fallthru
          _
        // Predicated region
        $region109: #{decoder_layer.1} parent=103 // pred_check
          %p790 = pneg %p86
        $region110: #{decoder_layer.1} parent=103 // pred_check_branch
          %792 = sbr.rel (%p790) target = $region112
        $region111: #{decoder_layer.1} parent=103 // pred_region
          %p793 = scmp.lt.s32.totalorder %s40, 1
          %s794 = scalar_select %p793, %s40, 1
          %s795 = smul.addr %s794, 2
          %s796 = smul.addr %s795, 8
          %s797 = scalar_lea.vmem %s1, %s796
        $region112: #{decoder_layer.1} parent=103 // pred_fallthru
          _
        // Predicated region
        $region113: #{decoder_layer.1} parent=103 // pred_check
          %p798 = pneg %p112
        $region114: #{decoder_layer.1} parent=103 // pred_check_branch
          %800 = sbr.rel (%p798) target = $region116
        $region115: #{decoder_layer.1} parent=103 // pred_region
          %p801 = scmp.lt.s32.totalorder %s40, 1
          %s802 = scalar_select %p801, %s40, 1
          %s803 = scalar_lea.vmem %s2, %s802
        $region116: #{decoder_layer.1} parent=103 // pred_fallthru
          _
        // Predicated region
        $region117: #{decoder_layer.1} parent=103 // pred_check
          %p804 = pneg %p138
        $region118: #{decoder_layer.1} parent=103 // pred_check_branch
          %806 = sbr.rel (%p804) target = $region120
        $region119: #{decoder_layer.1} parent=103 // pred_region
          %p807 = scmp.lt.s32.totalorder %s40, 1
          %s808 = scalar_select %p807, %s40, 1
          %s809 = scalar_lea.vmem %s3, %s808
        $region120: #{decoder_layer.1} parent=103 // pred_fallthru
          _
      $region104: #{decoder_layer.1} parent=5 // pred_fallthru
        _
      %p810 = scmp.le.s32.totalorder 1, %s40
      %p811 = scmp.lt.s32.totalorder %s40, 3
      %p812 = pnand %p810, %p811
      %p813 = pneg %p812
      // Predicated region
      $region121: #{decoder_layer.1} parent=5 // pred_check
        _
      $region122: #{decoder_layer.1} parent=5 // pred_check_branch
        %815 = sbr.rel (%p812) target = $region124
      $region123: #{decoder_layer.1} parent=5 // pred_region
        %s816 = ssub.s32 %s40, 1
        // Predicated region
        $region125: #{decoder_layer.1} parent=123 // pred_check
          %p817 = pneg %p354
        $region126: #{decoder_layer.1} parent=123 // pred_check_branch
          %819 = sbr.rel (%p817) target = $region128
        $region127: #{decoder_layer.1} parent=123 // pred_region
          %820 = dma.done [#allocation3], 16
        $region128: #{decoder_layer.1} parent=123 // pred_fallthru
          _
        // Predicated region
        $region129: #{decoder_layer.1} parent=123 // pred_check
          %p821 = pneg %p396
        $region130: #{decoder_layer.1} parent=123 // pred_check_branch
          %823 = sbr.rel (%p821) target = $region132
        $region131: #{decoder_layer.1} parent=123 // pred_region
          %824 = dma.done [#allocation6], 16
        $region132: #{decoder_layer.1} parent=123 // pred_fallthru
          _
        // Predicated region
        $region133: #{decoder_layer.1} parent=123 // pred_check
          %p825 = pneg %p417
        $region134: #{decoder_layer.1} parent=123 // pred_check_branch
          %827 = sbr.rel (%p825) target = $region136
        $region135: #{decoder_layer.1} parent=123 // pred_region
          %828 = dma.done [#allocation6], 128
        $region136: #{decoder_layer.1} parent=123 // pred_fallthru
          _
        // Predicated region
        $region137: #{decoder_layer.1} parent=123 // pred_check
          %p829 = pneg %p438
        $region138: #{decoder_layer.1} parent=123 // pred_check_branch
          %831 = sbr.rel (%p829) target = $region140
        $region139: #{decoder_layer.1} parent=123 // pred_region
          %832 = dma.done [#allocation9], 16
        $region140: #{decoder_layer.1} parent=123 // pred_fallthru
          _
        // Predicated region
        $region141: #{decoder_layer.1} parent=123 // pred_check
          %p833 = pneg %p459
        $region142: #{decoder_layer.1} parent=123 // pred_check_branch
          %835 = sbr.rel (%p833) target = $region144
        $region143: #{decoder_layer.1} parent=123 // pred_region
          %836 = dma.done [#allocation9], 16
        $region144: #{decoder_layer.1} parent=123 // pred_fallthru
          _
        // Predicated region
        $region145: #{decoder_layer.1} parent=123 // pred_check
          %p837 = pneg %p480
        $region146: #{decoder_layer.1} parent=123 // pred_check_branch
          %839 = sbr.rel (%p837) target = $region148
        $region147: #{decoder_layer.1} parent=123 // pred_region
          %840 = dma.done [#allocation12], 16
        $region148: #{decoder_layer.1} parent=123 // pred_fallthru
          _
        // Predicated region
        $region149: #{decoder_layer.1} parent=123 // pred_check
          %p841 = pneg %p522
        $region150: #{decoder_layer.1} parent=123 // pred_check_branch
          %843 = sbr.rel (%p841) target = $region152
        $region151: #{decoder_layer.1} parent=123 // pred_region
          %844 = dma.done [#allocation12], 16
        $region152: #{decoder_layer.1} parent=123 // pred_fallthru
          _
        // Predicated region
        $region153: #{decoder_layer.1} parent=123 // pred_check
          %p845 = pneg %p564
        $region154: #{decoder_layer.1} parent=123 // pred_check_branch
          %847 = sbr.rel (%p845) target = $region156
        $region155: #{decoder_layer.1} parent=123 // pred_region
          %848 = dma.done [#allocation15], 16
        $region156: #{decoder_layer.1} parent=123 // pred_fallthru
          _
        %p849 = scmp.lt.s32.totalorder %s45, 1
        %s850 = scalar_select %p849, %s45, 1
        %s851 = smul.addr %s850, 8
        %s852 = scalar_lea.vmem %s0, %s851
        %p853 = pneg %p66
        %p854 = pneg %p63
        %p855 = scmp.lt.s32.totalorder %s45, 1
        %s856 = scalar_select %p855, %s45, 1
        %s857 = smul.addr %s856, 2
        %s858 = smul.addr %s857, 8
        %s859 = scalar_lea.vmem %s1, %s858
        %p860 = pneg %p92
        %p861 = pneg %p89
        %p862 = scmp.lt.s32.totalorder %s45, 1
        %s863 = scalar_select %p862, %s45, 1
        %s864 = scalar_lea.vmem %s2, %s863
        %p865 = pneg %p118
        %p866 = pneg %p115
        %p867 = scmp.lt.s32.totalorder %s45, 1
        %s868 = scalar_select %p867, %s45, 1
        %s869 = scalar_lea.vmem %s3, %s868
        %p870 = pneg %p144
        %p871 = pneg %p141
        %p872 = pneg %p165
        %p873 = pneg %p162
        %p874 = pneg %p186
        %p875 = pneg %p183
        %p876 = pneg %p207
        %p877 = pneg %p204
        %p878 = pneg %p228
        %p879 = pneg %p225
        %p880 = pneg %p249
        %p881 = pneg %p246
        %p882 = pneg %p270
        %p883 = pneg %p267
        %p884 = pneg %p291
        %p885 = pneg %p288
        %p886 = pneg %p312
        %p887 = pneg %p309
        %p888 = pneg %p333
        %p889 = pneg %p330
        %p890 = pneg %p354
        %p891 = pneg %p351
        %p892 = pneg %p375
        %p893 = pneg %p372
        %p894 = pneg %p396
        %p895 = pneg %p393
        %p896 = pneg %p417
        %p897 = pneg %p414
        %p898 = pneg %p438
        %p899 = pneg %p435
        %p900 = pneg %p459
        %p901 = pneg %p456
        %p902 = pneg %p480
        %p903 = pneg %p477
        %p904 = pneg %p501
        %p905 = pneg %p498
        %p906 = pneg %p522
        %p907 = pneg %p519
        %p908 = pneg %p543
        %p909 = pneg %p540
        %p910 = pneg %p564
        %p911 = pneg %p561
        %p912 = pneg %p585
        %p913 = pneg %p582
        %p914 = pneg %p606
        %p915 = pneg %p603
        %p916 = pneg %p632
        %p917 = pneg %p629
        %s918 = sand.u32 %s619, 1
        %s919 = scalar_lea.sflag [#allocation4], %s918
        %s920 = sand.u32 %s619, 1
        %s921 = smul.addr %s920, 8
        %s922 = scalar_lea.vmem [#allocation16], %s921
        %p923 = scmp.lt.s32.totalorder %s45, 1
        %s924 = scalar_select %p923, %s45, 1
        %s925 = smul.addr %s924, 8
        %s926 = scalar_lea.vmem %s0, %s925
        %p927 = scmp.lt.s32.totalorder %s45, 1
        %s928 = scalar_select %p927, %s45, 1
        %s929 = smul.addr %s928, 2
        %s930 = smul.addr %s929, 8
        %s931 = scalar_lea.vmem %s1, %s930
        %p932 = scmp.lt.s32.totalorder %s45, 1
        %s933 = scalar_select %p932, %s45, 1
        %s934 = scalar_lea.vmem %s2, %s933
        %p935 = scmp.lt.s32.totalorder %s45, 1
        %s936 = scalar_select %p935, %s45, 1
        %s937 = scalar_lea.vmem %s3, %s936
        %v939 = vld [vmem:[%s926] sm:$0xff]
        %v940 = vld [vmem:[%s931] sm:$0xff]
        %v941 = vld [vmem:[%s931 + $0x8] sm:$0xff]
        %v942 = vld [vmem:[%s934] sm:$0x1]
        %v943 = vld [vmem:[%s4] sm:$0xf]
        %v944 = vld [vmem:[%s4 + $0x4] sm:$0xf]
        %v945 = vld [vmem:[%s4 + $0x8] sm:$0xf]
        %v946 = vld [vmem:[%s4 + $0xc] sm:$0xf]
        %v947 = vld [vmem:[%s5] sm:$0x1]
        %v948 = vld [vmem:[%s6] sm:$0xf]
        %v949 = vld [vmem:[%s6 + $0x4] sm:$0xf]
        %v950 = vld [vmem:[%s6 + $0x8] sm:$0xf]
        %v951 = vld [vmem:[%s6 + $0xc] sm:$0xf]
        %v952 = vld [vmem:[%s7] sm:$0x1]
        %v953 = vld [vmem:[%s8] sm:$0xf]
        %v954 = vld [vmem:[%s8 + $0x4] sm:$0xf]
        %v955 = vld [vmem:[%s9] sm:$0x1]
        %v956 = vld [vmem:[%s10] sm:$0x1]
        %v957 = vld [vmem:[%s11] sm:$0x1]
        %v958 = vpack.c.bf16 %v939, %v939
        %v960 = vlaneseq
        %v961 = vshrl.u32 %v960, 7
        %v962 = vsub.s32 0, %v961
        %v963 = vrot.slane %v947, %v962
        %v969 = vunpack.c.l.b16 %v943
        %v970 = vunpack.c.l.b16 %v944
        %v971 = vunpack.c.l.b16 %v945
        %v972 = vunpack.c.l.b16 %v946
        %v973 = vpack.c.b16 %v970, %v969
        %v974 = vpack.c.b16 %v972, %v971
        %vm977 = vcmask 261120
        %v979 = vsel %vm977, %v958, 0
        %981 = vmatprep.subr.bf16.mxu0 0
        %982 = vmatpush1.bf16.msra.mxu0 %v973
        %983 = vmatprep.subr.bf16.mxu0 0
        %984 = vmatpush1.bf16.msra.mxu0 %v974
        %985 = vmatprep.subr.bf16.mxu0 0
        %986 = vmatpush1.bf16.msra.mxu0 0
        %987 = vmatprep.subr.bf16.mxu0 0
        %988 = vmatpush1.bf16.msra.mxu0 0
        %989 = vmatprep.subr.bf16.mxu0 0
        %990 = vmatpush1.bf16.msra.mxu0 0
        %991 = vmatprep.subr.bf16.mxu0 0
        %992 = vmatpush1.bf16.msra.mxu0 0
        %993 = vmatprep.subr.bf16.mxu0 0
        %994 = vmatpush1.bf16.msra.mxu0 0
        %995 = vmatprep.subr.bf16.mxu0 0
        %996 = vmatpush1.bf16.msra.mxu0 0
        %997 = vmatprep.subr.bf16.mxu0 0
        %998 = vmatpush1.bf16.msra.mxu0 0
        %999 = vmatprep.subr.bf16.mxu0 0
        %1000 = vmatpush1.bf16.msra.mxu0 0
        %1001 = vmatprep.subr.bf16.mxu0 0
        %1002 = vmatpush1.bf16.msra.mxu0 0
        %1003 = vmatprep.subr.bf16.mxu0 0
        %1004 = vmatpush1.bf16.msra.mxu0 0
        %1005 = vmatprep.subr.bf16.mxu0 0
        %1006 = vmatpush1.bf16.msra.mxu0 0
        %1007 = vmatprep.subr.bf16.mxu0 0
        %1008 = vmatpush1.bf16.msra.mxu0 0
        %1009 = vmatprep.subr.bf16.mxu0 0
        %1010 = vmatpush1.bf16.msra.mxu0 0
        %1011 = vmatprep.subr.bf16.mxu0 0
        %1012 = vmatpush1.bf16.msra.mxu0 0
        %1013 = vmatprep.mubr.bf16.mxu0 0
        %1014 = vmatmul.mubr.bf16.gmra.mrb[0].mxu0 %v979
        %v1015 = vpop.f32.mrb[0].mxu0
        %v1016 = vadd.f32 %v963, %v1015
        %v1017 = vpop.f32.mrb[0].mxu0
        %v1018 = vpop.f32.mrb[0].mxu0
        %v1019 = vpop.f32.mrb[0].mxu0
        %1020 = vdwg.mxu0
        %v1022 = vlaneseq
        %v1023 = vshrl.u32 %v1022, 7
        %v1024 = vsub.s32 0, %v1023
        %v1025 = vrot.slane %v952, %v1024
        %v1031 = vunpack.c.l.b16 %v948
        %v1032 = vunpack.c.l.b16 %v949
        %v1033 = vunpack.c.l.b16 %v950
        %v1034 = vunpack.c.l.b16 %v951
        %v1035 = vpack.c.b16 %v1032, %v1031
        %v1036 = vpack.c.b16 %v1034, %v1033
        %1039 = vmatprep.subr.bf16.mxu0 0
        %1040 = vmatpush1.bf16.msra.mxu0 %v1035
        %1041 = vmatprep.subr.bf16.mxu0 0
        %1042 = vmatpush1.bf16.msra.mxu0 %v1036
        %1043 = vmatprep.subr.bf16.mxu0 0
        %1044 = vmatpush1.bf16.msra.mxu0 0
        %1045 = vmatprep.subr.bf16.mxu0 0
        %1046 = vmatpush1.bf16.msra.mxu0 0
        %1047 = vmatprep.subr.bf16.mxu0 0
        %1048 = vmatpush1.bf16.msra.mxu0 0
        %1049 = vmatprep.subr.bf16.mxu0 0
        %1050 = vmatpush1.bf16.msra.mxu0 0
        %1051 = vmatprep.subr.bf16.mxu0 0
        %1052 = vmatpush1.bf16.msra.mxu0 0
        %1053 = vmatprep.subr.bf16.mxu0 0
        %1054 = vmatpush1.bf16.msra.mxu0 0
        %1055 = vmatprep.subr.bf16.mxu0 0
        %1056 = vmatpush1.bf16.msra.mxu0 0
        %1057 = vmatprep.subr.bf16.mxu0 0
        %1058 = vmatpush1.bf16.msra.mxu0 0
        %1059 = vmatprep.subr.bf16.mxu0 0
        %1060 = vmatpush1.bf16.msra.mxu0 0
        %1061 = vmatprep.subr.bf16.mxu0 0
        %1062 = vmatpush1.bf16.msra.mxu0 0
        %1063 = vmatprep.subr.bf16.mxu0 0
        %1064 = vmatpush1.bf16.msra.mxu0 0
        %1065 = vmatprep.subr.bf16.mxu0 0
        %1066 = vmatpush1.bf16.msra.mxu0 0
        %1067 = vmatprep.subr.bf16.mxu0 0
        %1068 = vmatpush1.bf16.msra.mxu0 0
        %1069 = vmatprep.subr.bf16.mxu0 0
        %1070 = vmatpush1.bf16.msra.mxu0 0
        %1071 = vmatprep.mubr.bf16.mxu0 0
        %1072 = vmatmul.mubr.bf16.gmra.mrb[0].mxu0 %v979
        %v1073 = vpop.f32.mrb[0].mxu0
        %v1074 = vadd.f32 %v1025, %v1073
        %v1075 = vpop.f32.mrb[0].mxu0
        %v1076 = vpop.f32.mrb[0].mxu0
        %v1077 = vpop.f32.mrb[0].mxu0
        %1078 = vdwg.mxu0
        %v1079 = vpack.c.bf16 %v1016, %v1016
        %v1080 = vpack.c.bf16 %v1074, %v1074
        %vm1081 = vcmask 64512
        %v1083 = vsel %vm1081, %v1079, 0
        %v1086 = vsel %vm1081, %v1080, 0
        %1088 = vmatprep.subr.bf16.mxu0 0
        %1089 = vmatpush1.bf16.xpose.msra.mxu0 %v1086
        %1090 = vmatprep.subr.bf16.mxu0 0
        %1091 = vmatpush1.bf16.xpose.msra.mxu0 0
        %1092 = vmatprep.subr.bf16.mxu0 0
        %1093 = vmatpush1.bf16.xpose.msra.mxu0 0
        %1094 = vmatprep.subr.bf16.mxu0 0
        %1095 = vmatpush1.bf16.xpose.msra.mxu0 0
        %1096 = vmatprep.subr.bf16.mxu0 0
        %1097 = vmatpush1.bf16.xpose.msra.mxu0 0
        %1098 = vmatprep.subr.bf16.mxu0 0
        %1099 = vmatpush1.bf16.xpose.msra.mxu0 0
        %1100 = vmatprep.subr.bf16.mxu0 0
        %1101 = vmatpush1.bf16.xpose.msra.mxu0 0
        %1102 = vmatprep.subr.bf16.mxu0 0
        %1103 = vmatpush1.bf16.xpose.msra.mxu0 0
        %1104 = vmatprep.subr.bf16.mxu0 0
        %1105 = vmatpush1.bf16.xpose.msra.mxu0 0
        %1106 = vmatprep.subr.bf16.mxu0 0
        %1107 = vmatpush1.bf16.xpose.msra.mxu0 0
        %1108 = vmatprep.subr.bf16.mxu0 0
        %1109 = vmatpush1.bf16.xpose.msra.mxu0 0
        %1110 = vmatprep.subr.bf16.mxu0 0
        %1111 = vmatpush1.bf16.xpose.msra.mxu0 0
        %1112 = vmatprep.subr.bf16.mxu0 0
        %1113 = vmatpush1.bf16.xpose.msra.mxu0 0
        %1114 = vmatprep.subr.bf16.mxu0 0
        %1115 = vmatpush1.bf16.xpose.msra.mxu0 0
        %1116 = vmatprep.subr.bf16.mxu0 0
        %1117 = vmatpush1.bf16.xpose.msra.mxu0 0
        %1118 = vmatprep.subr.bf16.mxu0 0
        %1119 = vmatpush1.bf16.xpose.msra.mxu0 0
        %1120 = vmatprep.mubr.bf16.mxu0 0
        %1121 = vmatmul.mubr.bf16.gmra.mrb[0].mxu0 %v1083
        %v1122 = vpop.f32.mrb[0].mxu0
        %v1123 = vadd.f32 0.0, %v1122
        %v1124 = vpop.f32.mrb[0].mxu0
        %v1125 = vpop.f32.mrb[0].mxu0
        %v1126 = vpop.f32.mrb[0].mxu0
        %1127 = vdwg.mxu0
        %v1128 = vmul.f32 %v1123, 0.35355338
        %v1130 = vlaneseq
        %v1131 = vshrl.u32 %v1130, 7
        %v1132 = vsub.s32 0, %v1131
        %v1133 = vrot.slane %v942, %v1132
        %v1135 = vadd.f32 %v1128, %v1133
        %v1136 = vsel %vm1081, %v1135, -inf
        %1137 = vmax.xlane.f32.xlu0 %v1136
        %v1138 = vpop.xlane.xlu0 %1137
        %v1139 = vsub.f32 %v1135, %v1138
        %v1140 = vmul.f32 %v1139, 1.442695
        %v1141 = vpow.pop %v1140
        %v1142 = vsel %vm1081, %v1141, 0.0
        %1143 = vadd.xlane.f32.xlu0 %v1142
        %v1144 = vpop.xlane.xlu0 %1143
        %v1145 = vrcp.pop %v1144
        %v1146 = vmul.f32 %v1141, %v1145
        %v1147 = vpack.c.bf16 %v1146, %v1146
        %1149 = vrot.lane.b32.xlu0 %v1080, 112
        %v1150 = vpop.permute.xlu0 %1149
        %v1152 = vsel %vm1081, %v1147, 0
        %vm1154 = vcmask 1043456
        %v1156 = vsel %vm1154, %v1150, 0
        %1158 = vmatprep.subr.bf16.mxu0 0
        %1159 = vmatpush1.bf16.msra.mxu0 %v1156
        %1160 = vmatprep.subr.bf16.mxu0 0
        %1161 = vmatpush1.bf16.msra.mxu0 0
        %1162 = vmatprep.subr.bf16.mxu0 0
        %1163 = vmatpush1.bf16.msra.mxu0 0
        %1164 = vmatprep.subr.bf16.mxu0 0
        %1165 = vmatpush1.bf16.msra.mxu0 0
        %1166 = vmatprep.subr.bf16.mxu0 0
        %1167 = vmatpush1.bf16.msra.mxu0 0
        %1168 = vmatprep.subr.bf16.mxu0 0
        %1169 = vmatpush1.bf16.msra.mxu0 0
        %1170 = vmatprep.subr.bf16.mxu0 0
        %1171 = vmatpush1.bf16.msra.mxu0 0
        %1172 = vmatprep.subr.bf16.mxu0 0
        %1173 = vmatpush1.bf16.msra.mxu0 0
        %1174 = vmatprep.subr.bf16.mxu0 0
        %1175 = vmatpush1.bf16.msra.mxu0 0
        %1176 = vmatprep.subr.bf16.mxu0 0
        %1177 = vmatpush1.bf16.msra.mxu0 0
        %1178 = vmatprep.subr.bf16.mxu0 0
        %1179 = vmatpush1.bf16.msra.mxu0 0
        %1180 = vmatprep.subr.bf16.mxu0 0
        %1181 = vmatpush1.bf16.msra.mxu0 0
        %1182 = vmatprep.subr.bf16.mxu0 0
        %1183 = vmatpush1.bf16.msra.mxu0 0
        %1184 = vmatprep.subr.bf16.mxu0 0
        %1185 = vmatpush1.bf16.msra.mxu0 0
        %1186 = vmatprep.subr.bf16.mxu0 0
        %1187 = vmatpush1.bf16.msra.mxu0 0
        %1188 = vmatprep.subr.bf16.mxu0 0
        %1189 = vmatpush1.bf16.msra.mxu0 0
        %1190 = vmatprep.mubr.bf16.mxu0 0
        %1191 = vmatmul.mubr.bf16.gmra.mrb[0].mxu0 %v1152
        %v1192 = vpop.f32.mrb[0].mxu0
        %v1193 = vadd.f32 0.0, %v1192
        %v1194 = vpop.f32.mrb[0].mxu0
        %v1195 = vpop.f32.mrb[0].mxu0
        %v1196 = vpop.f32.mrb[0].mxu0
        %1197 = vdwg.mxu0
        %1199 = vrot.lane.b32.xlu0 %v1079, 120
        %v1200 = vpop.permute.xlu0 %1199
        %1201 = vrot.lane.b32.xlu0 %v1080, 120
        %v1202 = vpop.permute.xlu0 %1201
        %v1204 = vsel %vm1081, %v1200, 0
        %v1207 = vsel %vm1081, %v1202, 0
        %1209 = vmatprep.subr.bf16.mxu0 0
        %1210 = vmatpush1.bf16.xpose.msra.mxu0 %v1207
        %1211 = vmatprep.subr.bf16.mxu0 0
        %1212 = vmatpush1.bf16.xpose.msra.mxu0 0
        %1213 = vmatprep.subr.bf16.mxu0 0
        %1214 = vmatpush1.bf16.xpose.msra.mxu0 0
        %1215 = vmatprep.subr.bf16.mxu0 0
        %1216 = vmatpush1.bf16.xpose.msra.mxu0 0
        %1217 = vmatprep.subr.bf16.mxu0 0
        %1218 = vmatpush1.bf16.xpose.msra.mxu0 0
        %1219 = vmatprep.subr.bf16.mxu0 0
        %1220 = vmatpush1.bf16.xpose.msra.mxu0 0
        %1221 = vmatprep.subr.bf16.mxu0 0
        %1222 = vmatpush1.bf16.xpose.msra.mxu0 0
        %1223 = vmatprep.subr.bf16.mxu0 0
        %1224 = vmatpush1.bf16.xpose.msra.mxu0 0
        %1225 = vmatprep.subr.bf16.mxu0 0
        %1226 = vmatpush1.bf16.xpose.msra.mxu0 0
        %1227 = vmatprep.subr.bf16.mxu0 0
        %1228 = vmatpush1.bf16.xpose.msra.mxu0 0
        %1229 = vmatprep.subr.bf16.mxu0 0
        %1230 = vmatpush1.bf16.xpose.msra.mxu0 0
        %1231 = vmatprep.subr.bf16.mxu0 0
        %1232 = vmatpush1.bf16.xpose.msra.mxu0 0
        %1233 = vmatprep.subr.bf16.mxu0 0
        %1234 = vmatpush1.bf16.xpose.msra.mxu0 0
        %1235 = vmatprep.subr.bf16.mxu0 0
        %1236 = vmatpush1.bf16.xpose.msra.mxu0 0
        %1237 = vmatprep.subr.bf16.mxu0 0
        %1238 = vmatpush1.bf16.xpose.msra.mxu0 0
        %1239 = vmatprep.subr.bf16.mxu0 0
        %1240 = vmatpush1.bf16.xpose.msra.mxu0 0
        %1241 = vmatprep.mubr.bf16.mxu0 0
        %1242 = vmatmul.mubr.bf16.gmra.mrb[0].mxu0 %v1204
        %v1243 = vpop.f32.mrb[0].mxu0
        %v1244 = vadd.f32 0.0, %v1243
        %v1245 = vpop.f32.mrb[0].mxu0
        %v1246 = vpop.f32.mrb[0].mxu0
        %v1247 = vpop.f32.mrb[0].mxu0
        %1248 = vdwg.mxu0
        %v1249 = vmul.f32 %v1244, 0.35355338
        %v1250 = vadd.f32 %v1249, %v1133
        %v1251 = vsel %vm1081, %v1250, -inf
        %1252 = vmax.xlane.f32.xlu0 %v1251
        %v1253 = vpop.xlane.xlu0 %1252
        %v1254 = vsub.f32 %v1250, %v1253
        %v1255 = vmul.f32 %v1254, 1.442695
        %v1256 = vpow.pop %v1255
        %v1257 = vsel %vm1081, %v1256, 0.0
        %1258 = vadd.xlane.f32.xlu0 %v1257
        %v1259 = vpop.xlane.xlu0 %1258
        %v1260 = vrcp.pop %v1259
        %v1261 = vmul.f32 %v1256, %v1260
        %v1262 = vpack.c.bf16 %v1261, %v1261
        %1263 = vrot.lane.b32.xlu0 %v1080, 104
        %v1264 = vpop.permute.xlu0 %1263
        %v1266 = vsel %vm1081, %v1262, 0
        %v1269 = vsel %vm1154, %v1264, 0
        %1271 = vmatprep.subr.bf16.mxu0 0
        %1272 = vmatpush1.bf16.msra.mxu0 %v1269
        %1273 = vmatprep.subr.bf16.mxu0 0
        %1274 = vmatpush1.bf16.msra.mxu0 0
        %1275 = vmatprep.subr.bf16.mxu0 0
        %1276 = vmatpush1.bf16.msra.mxu0 0
        %1277 = vmatprep.subr.bf16.mxu0 0
        %1278 = vmatpush1.bf16.msra.mxu0 0
        %1279 = vmatprep.subr.bf16.mxu0 0
        %1280 = vmatpush1.bf16.msra.mxu0 0
        %1281 = vmatprep.subr.bf16.mxu0 0
        %1282 = vmatpush1.bf16.msra.mxu0 0
        %1283 = vmatprep.subr.bf16.mxu0 0
        %1284 = vmatpush1.bf16.msra.mxu0 0
        %1285 = vmatprep.subr.bf16.mxu0 0
        %1286 = vmatpush1.bf16.msra.mxu0 0
        %1287 = vmatprep.subr.bf16.mxu0 0
        %1288 = vmatpush1.bf16.msra.mxu0 0
        %1289 = vmatprep.subr.bf16.mxu0 0
        %1290 = vmatpush1.bf16.msra.mxu0 0
        %1291 = vmatprep.subr.bf16.mxu0 0
        %1292 = vmatpush1.bf16.msra.mxu0 0
        %1293 = vmatprep.subr.bf16.mxu0 0
        %1294 = vmatpush1.bf16.msra.mxu0 0
        %1295 = vmatprep.subr.bf16.mxu0 0
        %1296 = vmatpush1.bf16.msra.mxu0 0
        %1297 = vmatprep.subr.bf16.mxu0 0
        %1298 = vmatpush1.bf16.msra.mxu0 0
        %1299 = vmatprep.subr.bf16.mxu0 0
        %1300 = vmatpush1.bf16.msra.mxu0 0
        %1301 = vmatprep.subr.bf16.mxu0 0
        %1302 = vmatpush1.bf16.msra.mxu0 0
        %1303 = vmatprep.mubr.bf16.mxu0 0
        %1304 = vmatmul.mubr.bf16.gmra.mrb[0].mxu0 %v1266
        %v1305 = vpop.f32.mrb[0].mxu0
        %v1306 = vadd.f32 0.0, %v1305
        %v1307 = vpop.f32.mrb[0].mxu0
        %v1308 = vpop.f32.mrb[0].mxu0
        %v1309 = vpop.f32.mrb[0].mxu0
        %1310 = vdwg.mxu0
        %1312 = vrot.lane.b32.xlu0 %v1306, 8
        %v1313 = vpop.permute.xlu0 %1312
        %v1315 = vsel %vm1081, %v1193, %v1313
        %v1316 = vpack.c.bf16 %v1315, %v1315
        %v1318 = vlaneseq
        %v1319 = vshrl.u32 %v1318, 7
        %v1320 = vsub.s32 0, %v1319
        %v1321 = vrot.slane %v955, %v1320
        %v1325 = vunpack.c.l.b16 %v953
        %v1326 = vunpack.c.l.b16 %v954
        %v1327 = vpack.c.b16 %v1326, %v1325
        %vm1329 = vcmask 130048
        %v1331 = vsel %vm1329, %v1316, 0
        %1333 = vmatprep.subr.bf16.mxu0 0
        %1334 = vmatpush1.bf16.msra.mxu0 %v1327
        %1335 = vmatprep.subr.bf16.mxu0 0
        %1336 = vmatpush1.bf16.msra.mxu0 0
        %1337 = vmatprep.subr.bf16.mxu0 0
        %1338 = vmatpush1.bf16.msra.mxu0 0
        %1339 = vmatprep.subr.bf16.mxu0 0
        %1340 = vmatpush1.bf16.msra.mxu0 0
        %1341 = vmatprep.subr.bf16.mxu0 0
        %1342 = vmatpush1.bf16.msra.mxu0 0
        %1343 = vmatprep.subr.bf16.mxu0 0
        %1344 = vmatpush1.bf16.msra.mxu0 0
        %1345 = vmatprep.subr.bf16.mxu0 0
        %1346 = vmatpush1.bf16.msra.mxu0 0
        %1347 = vmatprep.subr.bf16.mxu0 0
        %1348 = vmatpush1.bf16.msra.mxu0 0
        %1349 = vmatprep.subr.bf16.mxu0 0
        %1350 = vmatpush1.bf16.msra.mxu0 0
        %1351 = vmatprep.subr.bf16.mxu0 0
        %1352 = vmatpush1.bf16.msra.mxu0 0
        %1353 = vmatprep.subr.bf16.mxu0 0
        %1354 = vmatpush1.bf16.msra.mxu0 0
        %1355 = vmatprep.subr.bf16.mxu0 0
        %1356 = vmatpush1.bf16.msra.mxu0 0
        %1357 = vmatprep.subr.bf16.mxu0 0
        %1358 = vmatpush1.bf16.msra.mxu0 0
        %1359 = vmatprep.subr.bf16.mxu0 0
        %1360 = vmatpush1.bf16.msra.mxu0 0
        %1361 = vmatprep.subr.bf16.mxu0 0
        %1362 = vmatpush1.bf16.msra.mxu0 0
        %1363 = vmatprep.subr.bf16.mxu0 0
        %1364 = vmatpush1.bf16.msra.mxu0 0
        %1365 = vmatprep.mubr.bf16.mxu0 0
        %1366 = vmatmul.mubr.bf16.gmra.mrb[0].mxu0 %v1331
        %v1367 = vpop.f32.mrb[0].mxu0
        %v1368 = vadd.f32 %v1321, %v1367
        %v1369 = vpop.f32.mrb[0].mxu0
        %v1370 = vpop.f32.mrb[0].mxu0
        %v1371 = vpop.f32.mrb[0].mxu0
        %1372 = vdwg.mxu0
        %v1373 = vadd.f32 %v1368, %v939
        %v1374 = vsel %vm977, %v1373, 0.0
        %1375 = vadd.xlane.f32.xlu0 %v1374
        %v1376 = vpop.xlane.xlu0 %1375
        %v1377 = vrcp.pop 32.0
        %v1378 = vmul.f32 %v1376, %v1377
        %v1379 = vsub.f32 %v1373, %v1378
        %v1380 = vmul.f32 %v1379, %v1379
        %v1381 = vsel %vm977, %v1380, 0.0
        %1382 = vadd.xlane.f32.xlu0 %v1381
        %v1383 = vpop.xlane.xlu0 %1382
        %v1384 = vmul.f32 %v1383, %v1377
        %v1385 = vadd.f32 %v1384, 1e-05
        %v1386 = vrsqrt.pop %v1385
        %v1387 = vmul.f32 %v1379, %v1386
        %v1389 = vlaneseq
        %v1390 = vshrl.u32 %v1389, 7
        %v1391 = vsub.s32 0, %v1390
        %v1392 = vrot.slane %v956, %v1391
        %v1394 = vmul.f32 %v1387, %v1392
        %v1396 = vlaneseq
        %v1397 = vshrl.u32 %v1396, 7
        %v1398 = vsub.s32 0, %v1397
        %v1399 = vrot.slane %v957, %v1398
        %v1401 = vadd.f32 %v1394, %v1399
        %v1402 = vld [vmem:[%s937] sm:$0x1]
        %v1403 = vld [vmem:[%s12] sm:$0xf]
        %v1404 = vld [vmem:[%s12 + $0x4] sm:$0xf]
        %v1405 = vld [vmem:[%s12 + $0x8] sm:$0xf]
        %v1406 = vld [vmem:[%s12 + $0xc] sm:$0xf]
        %v1407 = vld [vmem:[#allocation2] sm:$0x1]
        %v1408 = vld [vmem:[%s14] sm:$0xf]
        %v1409 = vld [vmem:[%s14 + $0x4] sm:$0xf]
        %v1410 = vld [vmem:[%s14 + $0x8] sm:$0xf]
        %v1411 = vld [vmem:[%s14 + $0xc] sm:$0xf]
        %v1412 = vld [vmem:[#allocation5] sm:$0x1]
        %v1413 = vld [vmem:[#allocation7] sm:$0xf]
        %v1414 = vld [vmem:[#allocation7 + $0x4] sm:$0xf]
        %v1415 = vld [vmem:[#allocation8] sm:$0x1]
        %v1416 = vld [vmem:[#allocation10] sm:$0x1]
        %v1417 = vld [vmem:[#allocation11] sm:$0x1]
        %v1418 = vpack.c.bf16 %v1401, %v1401
        %v1420 = vlaneseq
        %v1421 = vshrl.u32 %v1420, 7
        %v1422 = vsub.s32 0, %v1421
        %v1423 = vrot.slane %v1407, %v1422
        %v1429 = vunpack.c.l.b16 %v1403
        %v1430 = vunpack.c.l.b16 %v1404
        %v1431 = vunpack.c.l.b16 %v1405
        %v1432 = vunpack.c.l.b16 %v1406
        %v1433 = vpack.c.b16 %v1430, %v1429
        %v1434 = vpack.c.b16 %v1432, %v1431
        %v1438 = vsel %vm977, %v1418, 0
        %1440 = vmatprep.subr.bf16.mxu0 0
        %1441 = vmatpush1.bf16.msra.mxu0 %v1433
        %1442 = vmatprep.subr.bf16.mxu0 0
        %1443 = vmatpush1.bf16.msra.mxu0 %v1434
        %1444 = vmatprep.subr.bf16.mxu0 0
        %1445 = vmatpush1.bf16.msra.mxu0 0
        %1446 = vmatprep.subr.bf16.mxu0 0
        %1447 = vmatpush1.bf16.msra.mxu0 0
        %1448 = vmatprep.subr.bf16.mxu0 0
        %1449 = vmatpush1.bf16.msra.mxu0 0
        %1450 = vmatprep.subr.bf16.mxu0 0
        %1451 = vmatpush1.bf16.msra.mxu0 0
        %1452 = vmatprep.subr.bf16.mxu0 0
        %1453 = vmatpush1.bf16.msra.mxu0 0
        %1454 = vmatprep.subr.bf16.mxu0 0
        %1455 = vmatpush1.bf16.msra.mxu0 0
        %1456 = vmatprep.subr.bf16.mxu0 0
        %1457 = vmatpush1.bf16.msra.mxu0 0
        %1458 = vmatprep.subr.bf16.mxu0 0
        %1459 = vmatpush1.bf16.msra.mxu0 0
        %1460 = vmatprep.subr.bf16.mxu0 0
        %1461 = vmatpush1.bf16.msra.mxu0 0
        %1462 = vmatprep.subr.bf16.mxu0 0
        %1463 = vmatpush1.bf16.msra.mxu0 0
        %1464 = vmatprep.subr.bf16.mxu0 0
        %1465 = vmatpush1.bf16.msra.mxu0 0
        %1466 = vmatprep.subr.bf16.mxu0 0
        %1467 = vmatpush1.bf16.msra.mxu0 0
        %1468 = vmatprep.subr.bf16.mxu0 0
        %1469 = vmatpush1.bf16.msra.mxu0 0
        %1470 = vmatprep.subr.bf16.mxu0 0
        %1471 = vmatpush1.bf16.msra.mxu0 0
        %1472 = vmatprep.mubr.bf16.mxu0 0
        %1473 = vmatmul.mubr.bf16.gmra.mrb[0].mxu0 %v1438
        %v1474 = vpop.f32.mrb[0].mxu0
        %v1475 = vadd.f32 %v1423, %v1474
        %v1476 = vpop.f32.mrb[0].mxu0
        %v1477 = vpop.f32.mrb[0].mxu0
        %v1478 = vpop.f32.mrb[0].mxu0
        %1479 = vdwg.mxu0
        %v1480 = vpack.c.bf16 %v941, %v940
        %v1482 = vlaneseq
        %v1483 = vshrl.u32 %v1482, 7
        %v1484 = vsub.s32 0, %v1483
        %v1485 = vrot.slane %v1412, %v1484
        %v1491 = vunpack.c.l.b16 %v1408
        %v1492 = vunpack.c.l.b16 %v1409
        %v1493 = vunpack.c.l.b16 %v1410
        %v1494 = vunpack.c.l.b16 %v1411
        %v1495 = vpack.c.b16 %v1492, %v1491
        %v1496 = vpack.c.b16 %v1494, %v1493
        %v1500 = vsel %vm977, %v1480, 0
        %1502 = vmatprep.subr.bf16.mxu0 0
        %1503 = vmatpush1.bf16.msra.mxu0 %v1495
        %1504 = vmatprep.subr.bf16.mxu0 0
        %1505 = vmatpush1.bf16.msra.mxu0 %v1496
        %1506 = vmatprep.subr.bf16.mxu0 0
        %1507 = vmatpush1.bf16.msra.mxu0 0
        %1508 = vmatprep.subr.bf16.mxu0 0
        %1509 = vmatpush1.bf16.msra.mxu0 0
        %1510 = vmatprep.subr.bf16.mxu0 0
        %1511 = vmatpush1.bf16.msra.mxu0 0
        %1512 = vmatprep.subr.bf16.mxu0 0
        %1513 = vmatpush1.bf16.msra.mxu0 0
        %1514 = vmatprep.subr.bf16.mxu0 0
        %1515 = vmatpush1.bf16.msra.mxu0 0
        %1516 = vmatprep.subr.bf16.mxu0 0
        %1517 = vmatpush1.bf16.msra.mxu0 0
        %1518 = vmatprep.subr.bf16.mxu0 0
        %1519 = vmatpush1.bf16.msra.mxu0 0
        %1520 = vmatprep.subr.bf16.mxu0 0
        %1521 = vmatpush1.bf16.msra.mxu0 0
        %1522 = vmatprep.subr.bf16.mxu0 0
        %1523 = vmatpush1.bf16.msra.mxu0 0
        %1524 = vmatprep.subr.bf16.mxu0 0
        %1525 = vmatpush1.bf16.msra.mxu0 0
        %1526 = vmatprep.subr.bf16.mxu0 0
        %1527 = vmatpush1.bf16.msra.mxu0 0
        %1528 = vmatprep.subr.bf16.mxu0 0
        %1529 = vmatpush1.bf16.msra.mxu0 0
        %1530 = vmatprep.subr.bf16.mxu0 0
        %1531 = vmatpush1.bf16.msra.mxu0 0
        %1532 = vmatprep.subr.bf16.mxu0 0
        %1533 = vmatpush1.bf16.msra.mxu0 0
        %1534 = vmatprep.mubr.bf16.mxu0 0
        %1535 = vmatmul.mubr.bf16.gmra.mrb[0].mxu0 %v1500
        %v1536 = vpop.f32.mrb[0].mxu0
        %v1537 = vadd.f32 %v1485, %v1536
        %v1538 = vpop.f32.mrb[0].mxu0
        %v1539 = vpop.f32.mrb[0].mxu0
        %v1540 = vadd.f32 %v1485, %v1539
        %v1541 = vpop.f32.mrb[0].mxu0
        %1542 = vdwg.mxu0
        %v1543 = vpack.c.bf16 %v1475, %v1475
        %v1544 = vpack.c.bf16 %v1540, %v1537
        %v1546 = vsel %vm1081, %v1543, 0
        %v1549 = vsel %vm1081, %v1544, 0
        %1551 = vmatprep.subr.bf16.mxu0 0
        %1552 = vmatpush1.bf16.xpose.msra.mxu0 %v1549
        %1553 = vmatprep.subr.bf16.mxu0 0
        %1554 = vmatpush1.bf16.xpose.msra.mxu0 0
        %1555 = vmatprep.subr.bf16.mxu0 0
        %1556 = vmatpush1.bf16.xpose.msra.mxu0 0
        %1557 = vmatprep.subr.bf16.mxu0 0
        %1558 = vmatpush1.bf16.xpose.msra.mxu0 0
        %1559 = vmatprep.subr.bf16.mxu0 0
        %1560 = vmatpush1.bf16.xpose.msra.mxu0 0
        %1561 = vmatprep.subr.bf16.mxu0 0
        %1562 = vmatpush1.bf16.xpose.msra.mxu0 0
        %1563 = vmatprep.subr.bf16.mxu0 0
        %1564 = vmatpush1.bf16.xpose.msra.mxu0 0
        %1565 = vmatprep.subr.bf16.mxu0 0
        %1566 = vmatpush1.bf16.xpose.msra.mxu0 0
        %1567 = vmatprep.subr.bf16.mxu0 0
        %1568 = vmatpush1.bf16.xpose.msra.mxu0 0
        %1569 = vmatprep.subr.bf16.mxu0 0
        %1570 = vmatpush1.bf16.xpose.msra.mxu0 0
        %1571 = vmatprep.subr.bf16.mxu0 0
        %1572 = vmatpush1.bf16.xpose.msra.mxu0 0
        %1573 = vmatprep.subr.bf16.mxu0 0
        %1574 = vmatpush1.bf16.xpose.msra.mxu0 0
        %1575 = vmatprep.subr.bf16.mxu0 0
        %1576 = vmatpush1.bf16.xpose.msra.mxu0 0
        %1577 = vmatprep.subr.bf16.mxu0 0
        %1578 = vmatpush1.bf16.xpose.msra.mxu0 0
        %1579 = vmatprep.subr.bf16.mxu0 0
        %1580 = vmatpush1.bf16.xpose.msra.mxu0 0
        %1581 = vmatprep.subr.bf16.mxu0 0
        %1582 = vmatpush1.bf16.xpose.msra.mxu0 0
        %1583 = vmatprep.mubr.bf16.mxu0 0
        %1584 = vmatmul.mubr.bf16.gmra.mrb[0].mxu0 %v1546
        %v1585 = vpop.f32.mrb[0].mxu0
        %v1586 = vadd.f32 0.0, %v1585
        %v1587 = vpop.f32.mrb[0].mxu0
        %v1588 = vpop.f32.mrb[0].mxu0
        %v1589 = vpop.f32.mrb[0].mxu0
        %1590 = vdwg.mxu0
        %v1591 = vmul.f32 %v1586, 0.35355338
        %v1593 = vlaneseq
        %v1594 = vshrl.u32 %v1593, 7
        %v1595 = vsub.s32 0, %v1594
        %v1596 = vrot.slane %v1402, %v1595
        %v1598 = vadd.f32 %v1591, %v1596
        %v1599 = vsel %vm1329, %v1598, -inf
        %1600 = vmax.xlane.f32.xlu0 %v1599
        %v1601 = vpop.xlane.xlu0 %1600
        %v1602 = vsub.f32 %v1598, %v1601
        %v1603 = vmul.f32 %v1602, 1.442695
        %v1604 = vpow.pop %v1603
        %v1605 = vsel %vm1329, %v1604, 0.0
        %1606 = vadd.xlane.f32.xlu0 %v1605
        %v1607 = vpop.xlane.xlu0 %1606
        %v1608 = vrcp.pop %v1607
        %v1609 = vmul.f32 %v1604, %v1608
        %v1610 = vpack.c.bf16 %v1609, %v1609
        %1612 = vrot.lane.b32.xlu0 %v1544, 112
        %v1613 = vpop.permute.xlu0 %1612
        %v1616 = vsel %vm1329, %v1610, 0
        %1618 = vmatprep.subr.bf16.mxu0 0
        %1619 = vmatpush1.bf16.msra.mxu0 %v1613
        %1620 = vmatprep.subr.bf16.mxu0 0
        %1621 = vmatpush1.bf16.msra.mxu0 0
        %1622 = vmatprep.subr.bf16.mxu0 0
        %1623 = vmatpush1.bf16.msra.mxu0 0
        %1624 = vmatprep.subr.bf16.mxu0 0
        %1625 = vmatpush1.bf16.msra.mxu0 0
        %1626 = vmatprep.subr.bf16.mxu0 0
        %1627 = vmatpush1.bf16.msra.mxu0 0
        %1628 = vmatprep.subr.bf16.mxu0 0
        %1629 = vmatpush1.bf16.msra.mxu0 0
        %1630 = vmatprep.subr.bf16.mxu0 0
        %1631 = vmatpush1.bf16.msra.mxu0 0
        %1632 = vmatprep.subr.bf16.mxu0 0
        %1633 = vmatpush1.bf16.msra.mxu0 0
        %1634 = vmatprep.subr.bf16.mxu0 0
        %1635 = vmatpush1.bf16.msra.mxu0 0
        %1636 = vmatprep.subr.bf16.mxu0 0
        %1637 = vmatpush1.bf16.msra.mxu0 0
        %1638 = vmatprep.subr.bf16.mxu0 0
        %1639 = vmatpush1.bf16.msra.mxu0 0
        %1640 = vmatprep.subr.bf16.mxu0 0
        %1641 = vmatpush1.bf16.msra.mxu0 0
        %1642 = vmatprep.subr.bf16.mxu0 0
        %1643 = vmatpush1.bf16.msra.mxu0 0
        %1644 = vmatprep.subr.bf16.mxu0 0
        %1645 = vmatpush1.bf16.msra.mxu0 0
        %1646 = vmatprep.subr.bf16.mxu0 0
        %1647 = vmatpush1.bf16.msra.mxu0 0
        %1648 = vmatprep.subr.bf16.mxu0 0
        %1649 = vmatpush1.bf16.msra.mxu0 0
        %1650 = vmatprep.mubr.bf16.mxu0 0
        %1651 = vmatmul.mubr.bf16.gmra.mrb[0].mxu0 %v1616
        %v1652 = vpop.f32.mrb[0].mxu0
        %v1653 = vadd.f32 0.0, %v1652
        %v1654 = vpop.f32.mrb[0].mxu0
        %v1655 = vpop.f32.mrb[0].mxu0
        %v1656 = vpop.f32.mrb[0].mxu0
        %1657 = vdwg.mxu0
        %1659 = vrot.lane.b32.xlu0 %v1543, 120
        %v1660 = vpop.permute.xlu0 %1659
        %1661 = vrot.lane.b32.xlu0 %v1544, 120
        %v1662 = vpop.permute.xlu0 %1661
        %v1664 = vsel %vm1081, %v1660, 0
        %v1667 = vsel %vm1081, %v1662, 0
        %1669 = vmatprep.subr.bf16.mxu0 0
        %1670 = vmatpush1.bf16.xpose.msra.mxu0 %v1667
        %1671 = vmatprep.subr.bf16.mxu0 0
        %1672 = vmatpush1.bf16.xpose.msra.mxu0 0
        %1673 = vmatprep.subr.bf16.mxu0 0
        %1674 = vmatpush1.bf16.xpose.msra.mxu0 0
        %1675 = vmatprep.subr.bf16.mxu0 0
        %1676 = vmatpush1.bf16.xpose.msra.mxu0 0
        %1677 = vmatprep.subr.bf16.mxu0 0
        %1678 = vmatpush1.bf16.xpose.msra.mxu0 0
        %1679 = vmatprep.subr.bf16.mxu0 0
        %1680 = vmatpush1.bf16.xpose.msra.mxu0 0
        %1681 = vmatprep.subr.bf16.mxu0 0
        %1682 = vmatpush1.bf16.xpose.msra.mxu0 0
        %1683 = vmatprep.subr.bf16.mxu0 0
        %1684 = vmatpush1.bf16.xpose.msra.mxu0 0
        %1685 = vmatprep.subr.bf16.mxu0 0
        %1686 = vmatpush1.bf16.xpose.msra.mxu0 0
        %1687 = vmatprep.subr.bf16.mxu0 0
        %1688 = vmatpush1.bf16.xpose.msra.mxu0 0
        %1689 = vmatprep.subr.bf16.mxu0 0
        %1690 = vmatpush1.bf16.xpose.msra.mxu0 0
        %1691 = vmatprep.subr.bf16.mxu0 0
        %1692 = vmatpush1.bf16.xpose.msra.mxu0 0
        %1693 = vmatprep.subr.bf16.mxu0 0
        %1694 = vmatpush1.bf16.xpose.msra.mxu0 0
        %1695 = vmatprep.subr.bf16.mxu0 0
        %1696 = vmatpush1.bf16.xpose.msra.mxu0 0
        %1697 = vmatprep.subr.bf16.mxu0 0
        %1698 = vmatpush1.bf16.xpose.msra.mxu0 0
        %1699 = vmatprep.subr.bf16.mxu0 0
        %1700 = vmatpush1.bf16.xpose.msra.mxu0 0
        %1701 = vmatprep.mubr.bf16.mxu0 0
        %1702 = vmatmul.mubr.bf16.gmra.mrb[0].mxu0 %v1664
        %v1703 = vpop.f32.mrb[0].mxu0
        %v1704 = vadd.f32 0.0, %v1703
        %v1705 = vpop.f32.mrb[0].mxu0
        %v1706 = vpop.f32.mrb[0].mxu0
        %v1707 = vpop.f32.mrb[0].mxu0
        %1708 = vdwg.mxu0
        %v1709 = vmul.f32 %v1704, 0.35355338
        %v1710 = vadd.f32 %v1709, %v1596
        %v1711 = vsel %vm1329, %v1710, -inf
        %1712 = vmax.xlane.f32.xlu0 %v1711
        %v1713 = vpop.xlane.xlu0 %1712
        %v1714 = vsub.f32 %v1710, %v1713
        %v1715 = vmul.f32 %v1714, 1.442695
        %v1716 = vpow.pop %v1715
        %v1717 = vsel %vm1329, %v1716, 0.0
        %1718 = vadd.xlane.f32.xlu0 %v1717
        %v1719 = vpop.xlane.xlu0 %1718
        %v1720 = vrcp.pop %v1719
        %v1721 = vmul.f32 %v1716, %v1720
        %v1722 = vpack.c.bf16 %v1721, %v1721
        %1723 = vrot.lane.b32.xlu0 %v1544, 104
        %v1724 = vpop.permute.xlu0 %1723
        %v1727 = vsel %vm1329, %v1722, 0
        %1729 = vmatprep.subr.bf16.mxu0 0
        %1730 = vmatpush1.bf16.msra.mxu0 %v1724
        %1731 = vmatprep.subr.bf16.mxu0 0
        %1732 = vmatpush1.bf16.msra.mxu0 0
        %1733 = vmatprep.subr.bf16.mxu0 0
        %1734 = vmatpush1.bf16.msra.mxu0 0
        %1735 = vmatprep.subr.bf16.mxu0 0
        %1736 = vmatpush1.bf16.msra.mxu0 0
        %1737 = vmatprep.subr.bf16.mxu0 0
        %1738 = vmatpush1.bf16.msra.mxu0 0
        %1739 = vmatprep.subr.bf16.mxu0 0
        %1740 = vmatpush1.bf16.msra.mxu0 0
        %1741 = vmatprep.subr.bf16.mxu0 0
        %1742 = vmatpush1.bf16.msra.mxu0 0
        %1743 = vmatprep.subr.bf16.mxu0 0
        %1744 = vmatpush1.bf16.msra.mxu0 0
        %1745 = vmatprep.subr.bf16.mxu0 0
        %1746 = vmatpush1.bf16.msra.mxu0 0
        %1747 = vmatprep.subr.bf16.mxu0 0
        %1748 = vmatpush1.bf16.msra.mxu0 0
        %1749 = vmatprep.subr.bf16.mxu0 0
        %1750 = vmatpush1.bf16.msra.mxu0 0
        %1751 = vmatprep.subr.bf16.mxu0 0
        %1752 = vmatpush1.bf16.msra.mxu0 0
        %1753 = vmatprep.subr.bf16.mxu0 0
        %1754 = vmatpush1.bf16.msra.mxu0 0
        %1755 = vmatprep.subr.bf16.mxu0 0
        %1756 = vmatpush1.bf16.msra.mxu0 0
        %1757 = vmatprep.subr.bf16.mxu0 0
        %1758 = vmatpush1.bf16.msra.mxu0 0
        %1759 = vmatprep.subr.bf16.mxu0 0
        %1760 = vmatpush1.bf16.msra.mxu0 0
        %1761 = vmatprep.mubr.bf16.mxu0 0
        %1762 = vmatmul.mubr.bf16.gmra.mrb[0].mxu0 %v1727
        %v1763 = vpop.f32.mrb[0].mxu0
        %v1764 = vadd.f32 0.0, %v1763
        %v1765 = vpop.f32.mrb[0].mxu0
        %v1766 = vpop.f32.mrb[0].mxu0
        %v1767 = vpop.f32.mrb[0].mxu0
        %1768 = vdwg.mxu0
        %1770 = vrot.lane.b32.xlu0 %v1764, 8
        %v1771 = vpop.permute.xlu0 %1770
        %v1773 = vsel %vm1081, %v1653, %v1771
        %v1774 = vpack.c.bf16 %v1773, %v1773
        %v1776 = vlaneseq
        %v1777 = vshrl.u32 %v1776, 7
        %v1778 = vsub.s32 0, %v1777
        %v1779 = vrot.slane %v1415, %v1778
        %v1783 = vunpack.c.l.b16 %v1413
        %v1784 = vunpack.c.l.b16 %v1414
        %v1785 = vpack.c.b16 %v1784, %v1783
        %v1788 = vsel %vm1329, %v1774, 0
        %1790 = vmatprep.subr.bf16.mxu0 0
        %1791 = vmatpush1.bf16.msra.mxu0 %v1785
        %1792 = vmatprep.subr.bf16.mxu0 0
        %1793 = vmatpush1.bf16.msra.mxu0 0
        %1794 = vmatprep.subr.bf16.mxu0 0
        %1795 = vmatpush1.bf16.msra.mxu0 0
        %1796 = vmatprep.subr.bf16.mxu0 0
        %1797 = vmatpush1.bf16.msra.mxu0 0
        %1798 = vmatprep.subr.bf16.mxu0 0
        %1799 = vmatpush1.bf16.msra.mxu0 0
        %1800 = vmatprep.subr.bf16.mxu0 0
        %1801 = vmatpush1.bf16.msra.mxu0 0
        %1802 = vmatprep.subr.bf16.mxu0 0
        %1803 = vmatpush1.bf16.msra.mxu0 0
        %1804 = vmatprep.subr.bf16.mxu0 0
        %1805 = vmatpush1.bf16.msra.mxu0 0
        %1806 = vmatprep.subr.bf16.mxu0 0
        %1807 = vmatpush1.bf16.msra.mxu0 0
        %1808 = vmatprep.subr.bf16.mxu0 0
        %1809 = vmatpush1.bf16.msra.mxu0 0
        %1810 = vmatprep.subr.bf16.mxu0 0
        %1811 = vmatpush1.bf16.msra.mxu0 0
        %1812 = vmatprep.subr.bf16.mxu0 0
        %1813 = vmatpush1.bf16.msra.mxu0 0
        %1814 = vmatprep.subr.bf16.mxu0 0
        %1815 = vmatpush1.bf16.msra.mxu0 0
        %1816 = vmatprep.subr.bf16.mxu0 0
        %1817 = vmatpush1.bf16.msra.mxu0 0
        %1818 = vmatprep.subr.bf16.mxu0 0
        %1819 = vmatpush1.bf16.msra.mxu0 0
        %1820 = vmatprep.subr.bf16.mxu0 0
        %1821 = vmatpush1.bf16.msra.mxu0 0
        %1822 = vmatprep.mubr.bf16.mxu0 0
        %1823 = vmatmul.mubr.bf16.gmra.mrb[0].mxu0 %v1788
        %v1824 = vpop.f32.mrb[0].mxu0
        %v1825 = vadd.f32 %v1779, %v1824
        %v1826 = vpop.f32.mrb[0].mxu0
        %v1827 = vpop.f32.mrb[0].mxu0
        %v1828 = vpop.f32.mrb[0].mxu0
        %1829 = vdwg.mxu0
        %v1830 = vadd.f32 %v1825, %v1401
        %v1831 = vsel %vm977, %v1830, 0.0
        %1832 = vadd.xlane.f32.xlu0 %v1831
        %v1833 = vpop.xlane.xlu0 %1832
        %v1834 = vmul.f32 %v1833, %v1377
        %v1835 = vsub.f32 %v1830, %v1834
        %v1836 = vmul.f32 %v1835, %v1835
        %v1837 = vsel %vm977, %v1836, 0.0
        %1838 = vadd.xlane.f32.xlu0 %v1837
        %v1839 = vpop.xlane.xlu0 %1838
        %v1840 = vmul.f32 %v1839, %v1377
        %v1841 = vadd.f32 %v1840, 1e-05
        %v1842 = vrsqrt.pop %v1841
        %v1843 = vmul.f32 %v1835, %v1842
        %v1845 = vlaneseq
        %v1846 = vshrl.u32 %v1845, 7
        %v1847 = vsub.s32 0, %v1846
        %v1848 = vrot.slane %v1416, %v1847
        %v1850 = vmul.f32 %v1843, %v1848
        %v1852 = vlaneseq
        %v1853 = vshrl.u32 %v1852, 7
        %v1854 = vsub.s32 0, %v1853
        %v1855 = vrot.slane %v1417, %v1854
        %v1857 = vadd.f32 %v1850, %v1855
        %v1858 = vpack.c.bf16 %v1857, %v1857
        %v1859 = vld [vmem:[%s20] sm:$0xf]
        %v1860 = vld [vmem:[%s20 + $0x4] sm:$0xf]
        %v1861 = vld [vmem:[%s20 + $0x8] sm:$0xf]
        %v1862 = vld [vmem:[%s20 + $0xc] sm:$0xf]
        %v1863 = vld [vmem:[#allocation13] sm:$0x1]
        %v1865 = vlaneseq
        %v1866 = vshrl.u32 %v1865, 7
        %v1867 = vsub.s32 0, %v1866
        %v1868 = vrot.slane %v1863, %v1867
        %v1874 = vunpack.c.l.b16 %v1859
        %v1875 = vunpack.c.l.b16 %v1860
        %v1876 = vunpack.c.l.b16 %v1861
        %v1877 = vunpack.c.l.b16 %v1862
        %v1878 = vpack.c.b16 %v1875, %v1874
        %v1879 = vpack.c.b16 %v1877, %v1876
        %v1883 = vsel %vm977, %v1858, 0
        %1885 = vmatprep.subr.bf16.mxu0 0
        %1886 = vmatpush1.bf16.msra.mxu0 %v1878
        %1887 = vmatprep.subr.bf16.mxu0 0
        %1888 = vmatpush1.bf16.msra.mxu0 %v1879
        %1889 = vmatprep.subr.bf16.mxu0 0
        %1890 = vmatpush1.bf16.msra.mxu0 0
        %1891 = vmatprep.subr.bf16.mxu0 0
        %1892 = vmatpush1.bf16.msra.mxu0 0
        %1893 = vmatprep.subr.bf16.mxu0 0
        %1894 = vmatpush1.bf16.msra.mxu0 0
        %1895 = vmatprep.subr.bf16.mxu0 0
        %1896 = vmatpush1.bf16.msra.mxu0 0
        %1897 = vmatprep.subr.bf16.mxu0 0
        %1898 = vmatpush1.bf16.msra.mxu0 0
        %1899 = vmatprep.subr.bf16.mxu0 0
        %1900 = vmatpush1.bf16.msra.mxu0 0
        %1901 = vmatprep.subr.bf16.mxu0 0
        %1902 = vmatpush1.bf16.msra.mxu0 0
        %1903 = vmatprep.subr.bf16.mxu0 0
        %1904 = vmatpush1.bf16.msra.mxu0 0
        %1905 = vmatprep.subr.bf16.mxu0 0
        %1906 = vmatpush1.bf16.msra.mxu0 0
        %1907 = vmatprep.subr.bf16.mxu0 0
        %1908 = vmatpush1.bf16.msra.mxu0 0
        %1909 = vmatprep.subr.bf16.mxu0 0
        %1910 = vmatpush1.bf16.msra.mxu0 0
        %1911 = vmatprep.subr.bf16.mxu0 0
        %1912 = vmatpush1.bf16.msra.mxu0 0
        %1913 = vmatprep.subr.bf16.mxu0 0
        %1914 = vmatpush1.bf16.msra.mxu0 0
        %1915 = vmatprep.subr.bf16.mxu0 0
        %1916 = vmatpush1.bf16.msra.mxu0 0
        %1917 = vmatprep.mubr.bf16.mxu0 0
        %1918 = vmatmul.mubr.bf16.gmra.mrb[0].mxu0 %v1883
        %v1919 = vpop.f32.mrb[0].mxu0
        %v1920 = vadd.f32 %v1868, %v1919
        %v1921 = vpop.f32.mrb[0].mxu0
        %v1922 = vpop.f32.mrb[0].mxu0
        %v1923 = vpop.f32.mrb[0].mxu0
        %1924 = vdwg.mxu0
        %v1925 = vmax.f32 %v1920, 0.0
        %v1926 = vpack.c.bf16 %v1925, %v1925
        %v1927 = vld [vmem:[%s22] sm:$0xf]
        %v1928 = vld [vmem:[%s22 + $0x4] sm:$0xf]
        %v1929 = vld [vmem:[%s22 + $0x8] sm:$0xf]
        %v1930 = vld [vmem:[%s22 + $0xc] sm:$0xf]
        %v1931 = vld [vmem:[%s22 + $0x10] sm:$0xf]
        %v1932 = vld [vmem:[%s22 + $0x14] sm:$0xf]
        %v1933 = vld [vmem:[%s22 + $0x18] sm:$0xf]
        %v1934 = vld [vmem:[%s22 + $0x1c] sm:$0xf]
        %v1935 = vld [vmem:[#allocation14] sm:$0x1]
        %v1937 = vlaneseq
        %v1938 = vshrl.u32 %v1937, 7
        %v1939 = vsub.s32 0, %v1938
        %v1940 = vrot.slane %v1935, %v1939
        %v1950 = vunpack.c.l.b16 %v1927
        %v1951 = vunpack.c.l.b16 %v1928
        %v1952 = vunpack.c.l.b16 %v1929
        %v1953 = vunpack.c.l.b16 %v1930
        %v1954 = vunpack.c.l.b16 %v1931
        %v1955 = vunpack.c.l.b16 %v1932
        %v1956 = vunpack.c.l.b16 %v1933
        %v1957 = vunpack.c.l.b16 %v1934
        %v1958 = vpack.c.b16 %v1951, %v1950
        %v1959 = vpack.c.b16 %v1953, %v1952
        %v1960 = vpack.c.b16 %v1955, %v1954
        %v1961 = vpack.c.b16 %v1957, %v1956
        %vm1966 = vcmask 523264
        %v1968 = vsel %vm1966, %v1926, 0
        %1970 = vmatprep.subr.bf16.mxu0 0
        %1971 = vmatpush1.bf16.msra.mxu0 %v1958
        %1972 = vmatprep.subr.bf16.mxu0 0
        %1973 = vmatpush1.bf16.msra.mxu0 %v1959
        %1974 = vmatprep.subr.bf16.mxu0 0
        %1975 = vmatpush1.bf16.msra.mxu0 %v1960
        %1976 = vmatprep.subr.bf16.mxu0 0
        %1977 = vmatpush1.bf16.msra.mxu0 %v1961
        %1978 = vmatprep.subr.bf16.mxu0 0
        %1979 = vmatpush1.bf16.msra.mxu0 0
        %1980 = vmatprep.subr.bf16.mxu0 0
        %1981 = vmatpush1.bf16.msra.mxu0 0
        %1982 = vmatprep.subr.bf16.mxu0 0
        %1983 = vmatpush1.bf16.msra.mxu0 0
        %1984 = vmatprep.subr.bf16.mxu0 0
        %1985 = vmatpush1.bf16.msra.mxu0 0
        %1986 = vmatprep.subr.bf16.mxu0 0
        %1987 = vmatpush1.bf16.msra.mxu0 0
        %1988 = vmatprep.subr.bf16.mxu0 0
        %1989 = vmatpush1.bf16.msra.mxu0 0
        %1990 = vmatprep.subr.bf16.mxu0 0
        %1991 = vmatpush1.bf16.msra.mxu0 0
        %1992 = vmatprep.subr.bf16.mxu0 0
        %1993 = vmatpush1.bf16.msra.mxu0 0
        %1994 = vmatprep.subr.bf16.mxu0 0
        %1995 = vmatpush1.bf16.msra.mxu0 0
        %1996 = vmatprep.subr.bf16.mxu0 0
        %1997 = vmatpush1.bf16.msra.mxu0 0
        %1998 = vmatprep.subr.bf16.mxu0 0
        %1999 = vmatpush1.bf16.msra.mxu0 0
        %2000 = vmatprep.subr.bf16.mxu0 0
        %2001 = vmatpush1.bf16.msra.mxu0 0
        %2002 = vmatprep.mubr.bf16.mxu0 0
        %2003 = vmatmul.mubr.bf16.gmra.mrb[0].mxu0 %v1968
        %v2004 = vpop.f32.mrb[0].mxu0
        %v2005 = vadd.f32 %v1940, %v2004
        %v2006 = vpop.f32.mrb[0].mxu0
        %v2007 = vpop.f32.mrb[0].mxu0
        %v2008 = vpop.f32.mrb[0].mxu0
        %2009 = vdwg.mxu0
        %v2010 = vadd.f32 %v2005, %v1857
        %v2011 = vld [vmem:[%s24] sm:$0x1]
        %v2012 = vld [vmem:[%s25] sm:$0x1]
        %v2013 = vsel %vm977, %v2010, 0.0
        %2014 = vadd.xlane.f32.xlu0 %v2013
        %v2015 = vpop.xlane.xlu0 %2014
        %v2016 = vmul.f32 %v2015, %v1377
        %v2017 = vsub.f32 %v2010, %v2016
        %v2018 = vmul.f32 %v2017, %v2017
        %v2019 = vsel %vm977, %v2018, 0.0
        %2020 = vadd.xlane.f32.xlu0 %v2019
        %v2021 = vpop.xlane.xlu0 %2020
        %v2022 = vmul.f32 %v2021, %v1377
        %v2023 = vadd.f32 %v2022, 1e-05
        %v2024 = vrsqrt.pop %v2023
        %v2025 = vmul.f32 %v2017, %v2024
        %v2027 = vlaneseq
        %v2028 = vshrl.u32 %v2027, 7
        %v2029 = vsub.s32 0, %v2028
        %v2030 = vrot.slane %v2011, %v2029
        %v2032 = vmul.f32 %v2025, %v2030
        %v2034 = vlaneseq
        %v2035 = vshrl.u32 %v2034, 7
        %v2036 = vsub.s32 0, %v2035
        %v2037 = vrot.slane %v2012, %v2036
        %v2039 = vadd.f32 %v2032, %v2037
        %2040 = vst.msk [vmem:[%s922] sm:$0xff] %vm977, %v2039
        %s2041 = sand.u32 %s619, 1
        %s2042 = scalar_lea.sflag [#allocation4], %s2041
        %s2043 = sand.u32 %s619, 1
        %s2044 = smul.addr %s2043, 8
        %s2045 = scalar_lea.vmem [#allocation16], %s2044
        // Predicated region
        $region157: #{decoder_layer.1} parent=123 // pred_check
          %p2046 = pneg %p629
        $region158: #{decoder_layer.1} parent=123 // pred_check_branch
          %2048 = sbr.rel (%p2046) target = $region160
        $region159: #{decoder_layer.1} parent=123 // pred_region
          %s2050 = ssub.s32 128, 128
          %2051 = vsyncadd %s2042, %s2050
          %s2052 = smul.addr %s45, 128
          %s2053 = scalar_lea.hbm %s26, %s2052
          %s2055 = sshll.u32 %s2045, 4
          %s2056 = int_to_ptr.vmem [resolvable:$true] %s2055
          %2058 = dma.vmem_to_hbm [thread:$0]  %s2056, 128, %s2053, %s2042
        $region160: #{decoder_layer.1} parent=123 // pred_fallthru
          _
      $region124: #{decoder_layer.1} parent=5 // pred_fallthru
        _
      %p2059 = scmp.le.s32.totalorder 2, %s40
      // Predicated region
      $region161: #{decoder_layer.1} parent=5 // pred_check
        %p2060 = pneg %p2059
      $region162: #{decoder_layer.1} parent=5 // pred_check_branch
        %2062 = sbr.rel (%p2060) target = $region164
      $region163: #{decoder_layer.1} parent=5 // pred_region
        %s2063 = ssub.s32 %s40, 2
        // Predicated region
        $region165: #{decoder_layer.1} parent=163 // pred_check
          %p2064 = pneg %p635
        $region166: #{decoder_layer.1} parent=163 // pred_check_branch
          %2066 = sbr.rel (%p2064) target = $region168
        $region167: #{decoder_layer.1} parent=163 // pred_region
          %s2067 = sand.u32 %s620, 1
          %s2068 = scalar_lea.sflag [#allocation4], %s2067
          %s2069 = sand.u32 %s620, 1
          %s2070 = smul.addr %s2069, 8
          %s2071 = scalar_lea.vmem [#allocation16], %s2070
          %2072 = dma.done %s2068, 128
        $region168: #{decoder_layer.1} parent=163 // pred_fallthru
          _
      $region164: #{decoder_layer.1} parent=5 // pred_fallthru
        _
    $region6: #{decoder_layer.1} parent=1 // loop_footer
      %s44 = sadd.s32 1, %s40
    $region7: #{decoder_layer.1} parent=1 // loop_footer_branch
      %39 = sbr.rel target = $region3
    $region8: #{decoder_layer.1} parent=1 // loop_exit
      _
    %2073 = vsyncpa [#allocation3], 1
    %s2074 = scalar_lea.sflag [#allocation3], 1
    %2075 = vsyncpa %s2074, 1
    %2076 = vsyncpa [#allocation6], 1
    %2077 = vsyncpa [#allocation9], 1
    %2078 = vsyncpa [#allocation12], 1
    %2079 = vsyncpa [#allocation15], 1
    %2080 = vsyncpa [#allocation4], 1
    %s2081 = scalar_lea.sflag [#allocation4], 1
    %2082 = vsyncpa %s2081, 1

</llo_original>
